<compile_context>
chip_gen: v6e
topology: v6e:2x2x1
jax: 0.10.0
libtpu: 0.0.40
codegen_flags: <defaults>
</compile_context>

<pallas_src>
import jax
import jax.numpy as jnp
import numpy as np
from jax.experimental import pallas as pl
from jax.experimental.pallas import tpu as pltpu


def _silu(x):
    return x * jax.nn.sigmoid(x)


def _poly_cutoff(D, cutoff, p=9):
    # f(x) = 1 - (p+1)(p+2)/2 x^p + p(p+2) x^(p+1) - p(p+1)/2 x^(p+2), x = D/cutoff
    x = D * (1.0 / cutoff)
    xp = x ** p
    xp1 = xp * x
    xp2 = xp1 * x
    f = (1.0
         - 0.5 * (p + 1) * (p + 2) * xp
         + p * (p + 2) * xp1
         - 0.5 * p * (p + 1) * xp2)
    return f * (D < cutoff).astype(D.dtype)


def _make_kernel(cutoff):
    def kernel(a_ref, qd_ref, bd_ref, ed_ref, qlat_ref, blat_ref, rbf_ref, d_ref, nidx_ref,
               colid_ref, rep_ref, sum_ref,
               w1a_ref, b1a_ref, w2a_ref, b2a_ref,
               w1b_ref, b1b_ref, w2b_ref, b2b_ref,
               wr_ref, br_ref,
               a_out, qd_out, bd_out, ed_out, qlat_out, blat_out):
        F = a_ref.shape[2]

        a = a_ref[0]          # (A, F)
        qd = qd_ref[0]        # (A, F)
        bd = bd_ref[0]        # (AN, F)   flattened neighbour axis
        ed = ed_ref[0]        # (A, F)
        qlat = qlat_ref[0]    # (A, 1)
        blat = blat_ref[0]    # (AN, 1)
        rbf = rbf_ref[0]      # (AN, R)
        D = d_ref[0]          # (AN, 1)
        nidx = nidx_ref[0]    # (AN, 1) int32

        def dot(x, w):
            return jnp.dot(x, w, preferred_element_type=jnp.float32)

        # ---- fused atom-branch MLPs: phi_a / phi_q / phi_qm / phi_e ------------
        h_a = _silu(dot(a, w1a_ref[...]) + b1a_ref[...])          # (A, 4F)
        out2a = dot(h_a, w2a_ref[...]) + b2a_ref[...]             # (A, 3F+1)
        a_msij = out2a[:, 0:F]                                    # phi_a(a)
        qm = out2a[:, F:2 * F]                                    # phi_qm(a)
        e_gate = out2a[:, 2 * F:3 * F]                            # phi_e(a)
        q = out2a[:, 3 * F:3 * F + 1]                             # phi_q(a)  (A, 1)

        # ---- charge branch -----------------------------------------------------
        qlat_out[0] = qlat + q
        qd_new = qd + q * qm                                      # (A, F)
        qd_out[0] = qd_new

        # ---- fused gathers (one-hot matmul on MXU) ------------------------------
        # neighbour gather and self-broadcast for BOTH a_msij and q_dynamics in a
        # single pass each over the (AN, A) matrices.
        onehot = (colid_ref[...] == nidx).astype(jnp.float32)     # (AN, A)
        aq = jnp.concatenate([a_msij, qd_new], axis=1)            # (A, 2F)
        g_nbr = dot(onehot, aq)                                   # (AN, 2F)  j values
        g_self = dot(rep_ref[...], aq)                            # (AN, 2F)  i values
        aj = g_nbr[:, 0:F]
        qj = g_nbr[:, F:2 * F]
        ai = g_self[:, 0:F]
        qi = g_self[:, F:2 * F]

        # ---- rbf branch + polynomial cutoff -------------------------------------
        rbf_msij = dot(rbf, wr_ref[...]) + br_ref[...]            # (AN, F)
        fcut = _poly_cutoff(D, cutoff)                            # (AN, 1)
        msij = ai * aj * (rbf_msij * fcut)                        # (AN, F)

        # ---- fused bond-branch MLPs: phi_b / phi_bm -----------------------------
        h_b = _silu(dot(msij, w1b_ref[...]) + b1b_ref[...])       # (AN, 2F)
        out2b = dot(h_b, w2b_ref[...]) + b2b_ref[...]             # (AN, F+1)
        bm = out2b[:, 0:F]                                        # phi_bm(msij)
        bij = out2b[:, F:F + 1]                                   # phi_b(msij)  (AN, 1)

        blat_out[0] = blat + bij
        bd_new = bd + bij * bm                                    # (AN, F)
        bd_out[0] = bd_new

        # ---- electrostatic-like update ------------------------------------------
        qiqj = qi * qj                                            # (AN, F)
        d_inv = jnp.where(D == 0.0, 0.0, pl.reciprocal(D, approx=True))  # (AN, 1)
        x = d_inv * (qiqj - bd_new)                               # (AN, F)
        de_i = dot(sum_ref[...], x)                               # (A, F) neighbour sum
        de_i = e_gate * de_i
        a_out[0] = a + de_i
        ed_out[0] = ed + de_i

    return kernel


def message_passing(a, q_dynamics, b_dynamics, e_dynamics, q_latent, b_latent,
                    rbf, D, N, NM, params, cutoff):
    # NM (neighbour mask) is accepted for API parity but unused, exactly as in
    # the PyTorch forward.
    del NM
    (wr, br, wa1, ba1, wa2, ba2, wq1, bq1, wq2, bq2,
     wqm1, bqm1, wqm2, bqm2, wb1, bb1, wb2, bb2,
     wbm1, bbm1, wbm2, bbm2, we1, be1, we2, be2) = params

    B, A, F = a.shape
    NBR = D.shape[2]
    R = rbf.shape[3]
    AN = A * NBR
    f32 = jnp.float32

    # ---- wrapper-side weight fusion ----------------------------------------
    # shared-input first layers -> one wide matmul each
    W1a = jnp.concatenate([wa1, wq1, wqm1, we1], axis=1)          # (F, 4F)
    B1a = jnp.concatenate([ba1, bq1, bqm1, be1], axis=1)          # (1, 4F)
    # block-diagonal second layers (also packs the F->1 columns + their biases)
    W2a = jnp.zeros((4 * F, 3 * F + 1), f32)
    W2a = W2a.at[0:F, 0:F].set(wa2)                               # -> a_msij
    W2a = W2a.at[F:2 * F, 3 * F:3 * F + 1].set(wq2)               # -> q
    W2a = W2a.at[2 * F:3 * F, F:2 * F].set(wqm2)                  # -> qm
    W2a = W2a.at[3 * F:4 * F, 2 * F:3 * F].set(we2)               # -> e_gate
    B2a = jnp.concatenate([ba2, bqm2, be2, bq2], axis=1)          # (1, 3F+1)

    W1b = jnp.concatenate([wb1, wbm1], axis=1)                    # (F, 2F)
    B1b = jnp.concatenate([bb1, bbm1], axis=1)                    # (1, 2F)
    W2b = jnp.zeros((2 * F, F + 1), f32)
    W2b = W2b.at[0:F, F:F + 1].set(wb2)                           # -> bij
    W2b = W2b.at[F:2 * F, 0:F].set(wbm2)                          # -> bm
    B2b = jnp.concatenate([bbm2, bb2], axis=1)                    # (1, F+1)

    fused = [W1a, B1a, W2a, B2a, W1b, B1b, W2b, B2b, wr, br]

    # ---- flatten the neighbour axis into the sublane axis --------------------
    bd_flat = b_dynamics.reshape(B, AN, F)
    rbf_flat = rbf.reshape(B, AN, R)
    D_col = D.reshape(B, AN, 1)
    nidx_col = N.astype(jnp.int32).reshape(B, AN, 1)
    blat_col = b_latent.reshape(B, AN, 1)

    # ---- grid-invariant constants (hoisted iota / repeat / neighbour-sum) ----
    col_ids = jnp.arange(A, dtype=jnp.int32).reshape(1, A)                    # (1, A)
    rows = jnp.repeat(jnp.arange(A, dtype=jnp.int32), NBR)                    # (AN,)
    repmat = (rows[:, None] == jnp.arange(A, dtype=jnp.int32)[None, :]).astype(f32)  # (AN, A)
    sum_mat = repmat.T                                                        # (A, AN)

    data = [a, q_dynamics, bd_flat, e_dynamics, q_latent, blat_col,
            rbf_flat, D_col, nidx_col]
    consts = [col_ids, repmat, sum_mat]

    data_specs = [
        pl.BlockSpec((1, A, F), lambda b: (b, 0, 0)),
        pl.BlockSpec((1, A, F), lambda b: (b, 0, 0)),
        pl.BlockSpec((1, AN, F), lambda b: (b, 0, 0)),
        pl.BlockSpec((1, A, F), lambda b: (b, 0, 0)),
        pl.BlockSpec((1, A, 1), lambda b: (b, 0, 0)),
        pl.BlockSpec((1, AN, 1), lambda b: (b, 0, 0)),
        pl.BlockSpec((1, AN, R), lambda b: (b, 0, 0)),
        pl.BlockSpec((1, AN, 1), lambda b: (b, 0, 0)),
        pl.BlockSpec((1, AN, 1), lambda b: (b, 0, 0)),
    ]
    const_specs = [pl.BlockSpec(c.shape, lambda b: (0, 0)) for c in consts]
    weight_specs = [pl.BlockSpec(w.shape, lambda b: (0, 0)) for w in fused]

    out_shape = [
        jax.ShapeDtypeStruct((B, A, F), a.dtype),          # a
        jax.ShapeDtypeStruct((B, A, F), a.dtype),          # q_dynamics
        jax.ShapeDtypeStruct((B, AN, F), a.dtype),         # b_dynamics (flat)
        jax.ShapeDtypeStruct((B, A, F), a.dtype),          # e_dynamics
        jax.ShapeDtypeStruct((B, A, 1), a.dtype),          # q_latent
        jax.ShapeDtypeStruct((B, AN, 1), a.dtype),         # b_latent (flat)
    ]
    out_specs = [
        pl.BlockSpec((1, A, F), lambda b: (b, 0, 0)),
        pl.BlockSpec((1, A, F), lambda b: (b, 0, 0)),
        pl.BlockSpec((1, AN, F), lambda b: (b, 0, 0)),
        pl.BlockSpec((1, A, F), lambda b: (b, 0, 0)),
        pl.BlockSpec((1, A, 1), lambda b: (b, 0, 0)),
        pl.BlockSpec((1, AN, 1), lambda b: (b, 0, 0)),
    ]

    outs = pl.pallas_call(
        _make_kernel(cutoff),
        out_shape=out_shape,
        grid_spec=pltpu.PrefetchScalarGridSpec(
            num_scalar_prefetch=0,
            grid=(B,),
            in_specs=data_specs + const_specs + weight_specs,
            out_specs=out_specs,
        ),
        compiler_params=pltpu.CompilerParams(
            dimension_semantics=("parallel",),          # batch elems independent
            vmem_limit_bytes=48 * 1024 * 1024,
        ),
    )(*data, *consts, *fused)

    a_out, qd_out, bd_out, ed_out, qlat_out, blat_out = outs
    return (a_out, qd_out, bd_out.reshape(B, A, NBR, F), ed_out,
            qlat_out, blat_out.reshape(B, A, NBR))


def init_params(key, n_features, resolution):
    def dense_p(k, din, dout):
        k1, k2 = jax.random.split(k)
        w = jax.random.normal(k1, (din, dout), jnp.float32) / np.sqrt(din).astype(np.float32)
        b = 0.1 * jax.random.normal(k2, (1, dout), jnp.float32)
        return w, b

    F, R = n_features, resolution
    ks = jax.random.split(key, 13)
    wr, br = dense_p(ks[0], R, F)
    wa1, ba1 = dense_p(ks[1], F, F); wa2, ba2 = dense_p(ks[2], F, F)
    wq1, bq1 = dense_p(ks[3], F, F); wq2, bq2 = dense_p(ks[4], F, 1)
    wqm1, bqm1 = dense_p(ks[5], F, F); wqm2, bqm2 = dense_p(ks[6], F, F)
    wb1, bb1 = dense_p(ks[7], F, F); wb2, bb2 = dense_p(ks[8], F, 1)
    wbm1, bbm1 = dense_p(ks[9], F, F); wbm2, bbm2 = dense_p(ks[10], F, F)
    we1, be1 = dense_p(ks[11], F, F); we2, be2 = dense_p(ks[12], F, F)
    return [wr, br, wa1, ba1, wa2, ba2, wq1, bq1, wq2, bq2,
            wqm1, bqm1, wqm2, bqm2, wb1, bb1, wb2, bb2,
            wbm1, bbm1, wbm2, bbm2, we1, be1, we2, be2]


def reference(a, qd, bd, ed, qlat, blat, rbf, D, nidx, params, cutoff):
    (wr, br, wa1, ba1, wa2, ba2, wq1, bq1, wq2, bq2,
     wqm1, bqm1, wqm2, bqm2, wb1, bb1, wb2, bb2,
     wbm1, bbm1, wbm2, bbm2, we1, be1, we2, be2) = params

    def dense(x, w, b):
        return x @ w + b

    def mlp(x, w1, b1, w2, b2):
        return dense(_silu(dense(x, w1, b1)), w2, b2)

    def gather(v, idx):  # v: (B, A, F), idx: (B, A, NBR) -> (B, A, NBR, F)
        return jax.vmap(lambda vb, ib: vb[ib])(v, idx)

    rbf_msij = dense(rbf, wr, br) * _poly_cutoff(D, cutoff)[..., None]
    a_msij = mlp(a, wa1, ba1, wa2, ba2)
    msij = a_msij[:, :, None, :] * gather(a_msij, nidx) * rbf_msij
    q = mlp(a, wq1, bq1, wq2, bq2)
    qlat = qlat + q
    qd = qd + q * mlp(a, wqm1, bqm1, wqm2, bqm2)
    qiqj = qd[:, :, None, :] * gather(qd, nidx)
    bij = mlp(msij, wb1, bb1, wb2, bb2)
    blat = blat + bij[..., 0]
    bd = bd + bij * mlp(msij, wbm1, bbm1, wbm2, bbm2)
    d_inv = jnp.where(D == 0.0, 0.0, 1.0 / D)[..., None]
    de_i = jnp.sum(d_inv * (qiqj - bd), axis=2)
    de_i = mlp(a, we1, be1, we2, be2) * de_i
    return (a + de_i, qd, bd, ed + de_i, qlat, blat)


if __name__ == "__main__":
    key = jax.random.PRNGKey(0)
    B, A, NBR, F, R = 2, 8, 4, 32, 16
    cutoff = 5.0

    k = jax.random.split(key, 10)
    a = jax.random.normal(k[0], (B, A, F), jnp.float32)
    q_dynamics = 0.1 * jax.random.normal(k[1], (B, A, F), jnp.float32)
    b_dynamics = 0.1 * jax.random.normal(k[2], (B, A, NBR, F), jnp.float32)
    e_dynamics = 0.1 * jax.random.normal(k[3], (B, A, F), jnp.float32)
    q_latent = 0.1 * jax.random.normal(k[4], (B, A, 1), jnp.float32)
    b_latent = 0.1 * jax.random.normal(k[5], (B, A, NBR), jnp.float32)
    rbf = jax.random.normal(k[6], (B, A, NBR, R), jnp.float32)
    D = jax.random.uniform(k[7], (B, A, NBR), jnp.float32, 0.8, 1.3 * cutoff)
    D = D.at[0, 0, 0].set(0.0)   # exercises nan_to_num(1/D, posinf=0.0)
    N_idx = jax.random.randint(k[8], (B, A, NBR), 0, A, jnp.int32)
    NM = jnp.ones((B, A, NBR), jnp.float32)   # unused (as in the PyTorch forward)

    params = init_params(k[9], F, R)

    outs = message_passing(a, q_dynamics, b_dynamics, e_dynamics, q_latent,
                           b_latent, rbf, D, N_idx, NM, params, cutoff)
    outs = jax.block_until_ready(outs)

    refs = reference(a, q_dynamics, b_dynamics, e_dynamics, q_latent, b_latent,
                     rbf, D, N_idx, params, cutoff)
    for o, r in zip(outs, refs):
        np.testing.assert_allclose(np.asarray(o), np.asarray(r), rtol=5e-2, atol=5e-2)

    print("KERNEL_OK")
</pallas_src>

<mosaic_0001>
module attributes {stable_mosaic.version = 11 : i64} {
  func.func @kernel(%arg0: i32, %arg1: memref<1x8x32xf32, #tpu.memory_space<vmem>>, %arg2: memref<1x8x32xf32, #tpu.memory_space<vmem>>, %arg3: memref<1x32x32xf32, #tpu.memory_space<vmem>>, %arg4: memref<1x8x32xf32, #tpu.memory_space<vmem>>, %arg5: memref<1x8x1xf32, #tpu.memory_space<vmem>>, %arg6: memref<1x32x1xf32, #tpu.memory_space<vmem>>, %arg7: memref<1x32x16xf32, #tpu.memory_space<vmem>>, %arg8: memref<1x32x1xf32, #tpu.memory_space<vmem>>, %arg9: memref<1x32x1xi32, #tpu.memory_space<vmem>>, %arg10: memref<1x8xi32, #tpu.memory_space<vmem>>, %arg11: memref<32x8xf32, #tpu.memory_space<vmem>>, %arg12: memref<8x32xf32, #tpu.memory_space<vmem>>, %arg13: memref<32x128xf32, #tpu.memory_space<vmem>>, %arg14: memref<1x128xf32, #tpu.memory_space<vmem>>, %arg15: memref<128x97xf32, #tpu.memory_space<vmem>>, %arg16: memref<1x97xf32, #tpu.memory_space<vmem>>, %arg17: memref<32x64xf32, #tpu.memory_space<vmem>>, %arg18: memref<1x64xf32, #tpu.memory_space<vmem>>, %arg19: memref<64x33xf32, #tpu.memory_space<vmem>>, %arg20: memref<1x33xf32, #tpu.memory_space<vmem>>, %arg21: memref<16x32xf32, #tpu.memory_space<vmem>>, %arg22: memref<1x32xf32, #tpu.memory_space<vmem>>, %arg23: memref<1x8x32xf32, #tpu.memory_space<vmem>>, %arg24: memref<1x8x32xf32, #tpu.memory_space<vmem>>, %arg25: memref<1x32x32xf32, #tpu.memory_space<vmem>>, %arg26: memref<1x8x32xf32, #tpu.memory_space<vmem>>, %arg27: memref<1x8x1xf32, #tpu.memory_space<vmem>>, %arg28: memref<1x32x1xf32, #tpu.memory_space<vmem>>) attributes {dimension_semantics = [#tpu.dimension_semantics<parallel>], iteration_bounds = array<i64: 2>, scalar_prefetch = 0 : i64, scratch_operands = 0 : i64, tpu.core_type = #tpu.core_type<tc>, window_params = [{transform_indices = @transform_0, window_bounds = array<i64: 1, 8, 32>}, {transform_indices = @transform_1, window_bounds = array<i64: 1, 8, 32>}, {transform_indices = @transform_2, window_bounds = array<i64: 1, 32, 32>}, {transform_indices = @transform_3, window_bounds = array<i64: 1, 8, 32>}, {transform_indices = @transform_4, window_bounds = array<i64: 1, 8, 1>}, {transform_indices = @transform_5, window_bounds = array<i64: 1, 32, 1>}, {transform_indices = @transform_6, window_bounds = array<i64: 1, 32, 16>}, {transform_indices = @transform_7, window_bounds = array<i64: 1, 32, 1>}, {transform_indices = @transform_8, window_bounds = array<i64: 1, 32, 1>}, {pipeline_mode = #tpu.pipeline_mode<synchronous>, transform_indices = @transform_9, window_bounds = array<i64: 1, 8>}, {pipeline_mode = #tpu.pipeline_mode<synchronous>, transform_indices = @transform_10, window_bounds = array<i64: 32, 8>}, {pipeline_mode = #tpu.pipeline_mode<synchronous>, transform_indices = @transform_11, window_bounds = array<i64: 8, 32>}, {pipeline_mode = #tpu.pipeline_mode<synchronous>, transform_indices = @transform_12, window_bounds = array<i64: 32, 128>}, {pipeline_mode = #tpu.pipeline_mode<synchronous>, transform_indices = @transform_13, window_bounds = array<i64: 1, 128>}, {pipeline_mode = #tpu.pipeline_mode<synchronous>, transform_indices = @transform_14, window_bounds = array<i64: 128, 97>}, {pipeline_mode = #tpu.pipeline_mode<synchronous>, transform_indices = @transform_15, window_bounds = array<i64: 1, 97>}, {pipeline_mode = #tpu.pipeline_mode<synchronous>, transform_indices = @transform_16, window_bounds = array<i64: 32, 64>}, {pipeline_mode = #tpu.pipeline_mode<synchronous>, transform_indices = @transform_17, window_bounds = array<i64: 1, 64>}, {pipeline_mode = #tpu.pipeline_mode<synchronous>, transform_indices = @transform_18, window_bounds = array<i64: 64, 33>}, {pipeline_mode = #tpu.pipeline_mode<synchronous>, transform_indices = @transform_19, window_bounds = array<i64: 1, 33>}, {pipeline_mode = #tpu.pipeline_mode<synchronous>, transform_indices = @transform_20, window_bounds = array<i64: 16, 32>}, {pipeline_mode = #tpu.pipeline_mode<synchronous>, transform_indices = @transform_21, window_bounds = array<i64: 1, 32>}, {transform_indices = @transform_22, window_bounds = array<i64: 1, 8, 32>}, {transform_indices = @transform_23, window_bounds = array<i64: 1, 8, 32>}, {transform_indices = @transform_24, window_bounds = array<i64: 1, 32, 32>}, {transform_indices = @transform_25, window_bounds = array<i64: 1, 8, 32>}, {transform_indices = @transform_26, window_bounds = array<i64: 1, 8, 1>}, {transform_indices = @transform_27, window_bounds = array<i64: 1, 32, 1>}]} {
    %c0 = arith.constant 0 : index
    %c0_0 = arith.constant 0 : index
    %c0_1 = arith.constant 0 : index
    %0 = vector.load %arg1[%c0, %c0_0, %c0_1] : memref<1x8x32xf32, #tpu.memory_space<vmem>>, vector<1x8x32xf32>
    %1 = vector.shape_cast %0 : vector<1x8x32xf32> to vector<8x32xf32>
    %c0_2 = arith.constant 0 : index
    %c0_3 = arith.constant 0 : index
    %c0_4 = arith.constant 0 : index
    %2 = vector.load %arg2[%c0_2, %c0_3, %c0_4] : memref<1x8x32xf32, #tpu.memory_space<vmem>>, vector<1x8x32xf32>
    %3 = vector.shape_cast %2 : vector<1x8x32xf32> to vector<8x32xf32>
    %c0_5 = arith.constant 0 : index
    %c0_6 = arith.constant 0 : index
    %c0_7 = arith.constant 0 : index
    %4 = vector.load %arg3[%c0_5, %c0_6, %c0_7] : memref<1x32x32xf32, #tpu.memory_space<vmem>>, vector<1x32x32xf32>
    %5 = vector.shape_cast %4 : vector<1x32x32xf32> to vector<32x32xf32>
    %c0_8 = arith.constant 0 : index
    %c0_9 = arith.constant 0 : index
    %c0_10 = arith.constant 0 : index
    %6 = vector.load %arg4[%c0_8, %c0_9, %c0_10] : memref<1x8x32xf32, #tpu.memory_space<vmem>>, vector<1x8x32xf32>
    %7 = vector.shape_cast %6 : vector<1x8x32xf32> to vector<8x32xf32>
    %c0_11 = arith.constant 0 : index
    %c0_12 = arith.constant 0 : index
    %c0_13 = arith.constant 0 : index
    %8 = vector.load %arg5[%c0_11, %c0_12, %c0_13] : memref<1x8x1xf32, #tpu.memory_space<vmem>>, vector<1x8x1xf32>
    %9 = vector.shape_cast %8 : vector<1x8x1xf32> to vector<8x1xf32>
    %c0_14 = arith.constant 0 : index
    %c0_15 = arith.constant 0 : index
    %c0_16 = arith.constant 0 : index
    %10 = vector.load %arg6[%c0_14, %c0_15, %c0_16] : memref<1x32x1xf32, #tpu.memory_space<vmem>>, vector<1x32x1xf32>
    %11 = vector.shape_cast %10 : vector<1x32x1xf32> to vector<32x1xf32>
    %c0_17 = arith.constant 0 : index
    %c0_18 = arith.constant 0 : index
    %c0_19 = arith.constant 0 : index
    %12 = vector.load %arg7[%c0_17, %c0_18, %c0_19] : memref<1x32x16xf32, #tpu.memory_space<vmem>>, vector<1x32x16xf32>
    %13 = vector.shape_cast %12 : vector<1x32x16xf32> to vector<32x16xf32>
    %c0_20 = arith.constant 0 : index
    %c0_21 = arith.constant 0 : index
    %c0_22 = arith.constant 0 : index
    %14 = vector.load %arg8[%c0_20, %c0_21, %c0_22] : memref<1x32x1xf32, #tpu.memory_space<vmem>>, vector<1x32x1xf32>
    %15 = vector.shape_cast %14 : vector<1x32x1xf32> to vector<32x1xf32>
    %c0_23 = arith.constant 0 : index
    %c0_24 = arith.constant 0 : index
    %c0_25 = arith.constant 0 : index
    %16 = vector.load %arg9[%c0_23, %c0_24, %c0_25] : memref<1x32x1xi32, #tpu.memory_space<vmem>>, vector<1x32x1xi32>
    %17 = vector.shape_cast %16 : vector<1x32x1xi32> to vector<32x1xi32>
    %c0_26 = arith.constant 0 : index
    %c0_27 = arith.constant 0 : index
    %18 = vector.load %arg13[%c0_26, %c0_27] : memref<32x128xf32, #tpu.memory_space<vmem>>, vector<32x128xf32>
    %cst = arith.constant dense<0.000000e+00> : vector<8x128xf32>
    %19 = tpu.matmul %1, %18, %cst {dimension_numbers = #tpu.dot_dimension_numbers<[1], [0], [0], [1], [0, 0, 1, 1], [], []>} : vector<8x32xf32>, vector<32x128xf32>, vector<8x128xf32> -> vector<8x128xf32>
    %c0_28 = arith.constant 0 : index
    %c0_29 = arith.constant 0 : index
    %20 = vector.load %arg14[%c0_28, %c0_29] : memref<1x128xf32, #tpu.memory_space<vmem>>, vector<1x128xf32>
    %21 = vector.broadcast %20 : vector<1x128xf32> to vector<8x128xf32>
    %22 = arith.addf %19, %21 : vector<8x128xf32>
    %23 = arith.negf %22 : vector<8x128xf32>
    %24 = math.exp %23 : vector<8x128xf32>
    %cst_30 = arith.constant 1.000000e+00 : f32
    %25 = vector.broadcast %cst_30 : f32 to vector<8x128xf32>
    %26 = arith.addf %25, %24 : vector<8x128xf32>
    %27 = arith.divf %25, %26 : vector<8x128xf32>
    %28 = arith.mulf %22, %27 : vector<8x128xf32>
    %c0_31 = arith.constant 0 : index
    %c0_32 = arith.constant 0 : index
    %29 = vector.load %arg15[%c0_31, %c0_32] : memref<128x97xf32, #tpu.memory_space<vmem>>, vector<128x97xf32>
    %cst_33 = arith.constant dense<0.000000e+00> : vector<8x97xf32>
    %30 = tpu.matmul %28, %29, %cst_33 {dimension_numbers = #tpu.dot_dimension_numbers<[1], [0], [0], [1], [0, 0, 1, 1], [], []>} : vector<8x128xf32>, vector<128x97xf32>, vector<8x97xf32> -> vector<8x97xf32>
    %c0_34 = arith.constant 0 : index
    %c0_35 = arith.constant 0 : index
    %31 = vector.load %arg16[%c0_34, %c0_35] : memref<1x97xf32, #tpu.memory_space<vmem>>, vector<1x97xf32>
    %32 = vector.broadcast %31 : vector<1x97xf32> to vector<8x97xf32>
    %33 = arith.addf %30, %32 : vector<8x97xf32>
    %34 = vector.extract_strided_slice %33 {offsets = [0, 0], sizes = [8, 32], strides = [1, 1]} : vector<8x97xf32> to vector<8x32xf32>
    %35 = vector.extract_strided_slice %33 {offsets = [0, 32], sizes = [8, 32], strides = [1, 1]} : vector<8x97xf32> to vector<8x32xf32>
    %36 = vector.extract_strided_slice %33 {offsets = [0, 64], sizes = [8, 32], strides = [1, 1]} : vector<8x97xf32> to vector<8x32xf32>
    %37 = vector.extract_strided_slice %33 {offsets = [0, 96], sizes = [8, 1], strides = [1, 1]} : vector<8x97xf32> to vector<8x1xf32>
    %38 = arith.addf %9, %37 : vector<8x1xf32>
    %c0_36 = arith.constant 0 : index
    %c0_37 = arith.constant 0 : index
    %c0_38 = arith.constant 0 : index
    %39 = vector.load %arg27[%c0_36, %c0_37, %c0_38] : memref<1x8x1xf32, #tpu.memory_space<vmem>>, vector<1x8x1xf32>
    %40 = vector.shape_cast %39 : vector<1x8x1xf32> to vector<8x1xf32>
    %41 = vector.shape_cast %38 : vector<8x1xf32> to vector<1x8x1xf32>
    tpu.vector_store %arg27[%c0_36, %c0_37, %c0_38], %41 {strides = array<i32>} : memref<1x8x1xf32, #tpu.memory_space<vmem>>, vector<1x8x1xf32>,
    %42 = vector.broadcast %37 : vector<8x1xf32> to vector<8x32xf32>
    %43 = arith.mulf %42, %35 : vector<8x32xf32>
    %44 = arith.addf %3, %43 : vector<8x32xf32>
    %c0_39 = arith.constant 0 : index
    %c0_40 = arith.constant 0 : index
    %c0_41 = arith.constant 0 : index
    %45 = vector.load %arg24[%c0_39, %c0_40, %c0_41] : memref<1x8x32xf32, #tpu.memory_space<vmem>>, vector<1x8x32xf32>
    %46 = vector.shape_cast %45 : vector<1x8x32xf32> to vector<8x32xf32>
    %47 = vector.shape_cast %44 : vector<8x32xf32> to vector<1x8x32xf32>
    tpu.vector_store %arg24[%c0_39, %c0_40, %c0_41], %47 {strides = array<i32>} : memref<1x8x32xf32, #tpu.memory_space<vmem>>, vector<1x8x32xf32>,
    %c0_42 = arith.constant 0 : index
    %c0_43 = arith.constant 0 : index
    %48 = vector.load %arg10[%c0_42, %c0_43] : memref<1x8xi32, #tpu.memory_space<vmem>>, vector<1x8xi32>
    %49 = vector.broadcast %48 : vector<1x8xi32> to vector<32x8xi32>
    %50 = vector.broadcast %17 : vector<32x1xi32> to vector<32x8xi32>
    %51 = arith.cmpi eq, %49, %50 : vector<32x8xi32>
    %52 = arith.extui %51 : vector<32x8xi1> to vector<32x8xi32>
    %53 = arith.sitofp %52 : vector<32x8xi32> to vector<32x8xf32>
    %54 = tpu.concatenate %34, %44 in 1 : vector<8x32xf32>, vector<8x32xf32> -> vector<8x64xf32>
    %cst_44 = arith.constant dense<0.000000e+00> : vector<32x64xf32>
    %55 = tpu.matmul %53, %54, %cst_44 {dimension_numbers = #tpu.dot_dimension_numbers<[1], [0], [0], [1], [0, 0, 1, 1], [], []>} : vector<32x8xf32>, vector<8x64xf32>, vector<32x64xf32> -> vector<32x64xf32>
    %c0_45 = arith.constant 0 : index
    %c0_46 = arith.constant 0 : index
    %56 = vector.load %arg11[%c0_45, %c0_46] : memref<32x8xf32, #tpu.memory_space<vmem>>, vector<32x8xf32>
    %cst_47 = arith.constant dense<0.000000e+00> : vector<32x64xf32>
    %57 = tpu.matmul %56, %54, %cst_47 {dimension_numbers = #tpu.dot_dimension_numbers<[1], [0], [0], [1], [0, 0, 1, 1], [], []>} : vector<32x8xf32>, vector<8x64xf32>, vector<32x64xf32> -> vector<32x64xf32>
    %58 = vector.extract_strided_slice %55 {offsets = [0, 0], sizes = [32, 32], strides = [1, 1]} : vector<32x64xf32> to vector<32x32xf32>
    %59 = vector.extract_strided_slice %55 {offsets = [0, 32], sizes = [32, 32], strides = [1, 1]} : vector<32x64xf32> to vector<32x32xf32>
    %60 = vector.extract_strided_slice %57 {offsets = [0, 0], sizes = [32, 32], strides = [1, 1]} : vector<32x64xf32> to vector<32x32xf32>
    %61 = vector.extract_strided_slice %57 {offsets = [0, 32], sizes = [32, 32], strides = [1, 1]} : vector<32x64xf32> to vector<32x32xf32>
    %c0_48 = arith.constant 0 : index
    %c0_49 = arith.constant 0 : index
    %62 = vector.load %arg21[%c0_48, %c0_49] : memref<16x32xf32, #tpu.memory_space<vmem>>, vector<16x32xf32>
    %cst_50 = arith.constant dense<0.000000e+00> : vector<32x32xf32>
    %63 = tpu.matmul %13, %62, %cst_50 {dimension_numbers = #tpu.dot_dimension_numbers<[1], [0], [0], [1], [0, 0, 1, 1], [], []>} : vector<32x16xf32>, vector<16x32xf32>, vector<32x32xf32> -> vector<32x32xf32>
    %c0_51 = arith.constant 0 : index
    %c0_52 = arith.constant 0 : index
    %64 = vector.load %arg22[%c0_51, %c0_52] : memref<1x32xf32, #tpu.memory_space<vmem>>, vector<1x32xf32>
    %65 = vector.broadcast %64 : vector<1x32xf32> to vector<32x32xf32>
    %66 = arith.addf %63, %65 : vector<32x32xf32>
    %cst_53 = arith.constant 2.000000e-01 : f32
    %67 = vector.broadcast %cst_53 : f32 to vector<32x1xf32>
    %68 = arith.mulf %15, %67 : vector<32x1xf32>
    %69 = arith.mulf %68, %68 : vector<32x1xf32>
    %70 = arith.mulf %69, %69 : vector<32x1xf32>
    %71 = arith.mulf %70, %70 : vector<32x1xf32>
    %72 = arith.mulf %68, %71 : vector<32x1xf32>
    %73 = arith.mulf %72, %68 : vector<32x1xf32>
    %74 = arith.mulf %73, %68 : vector<32x1xf32>
    %cst_54 = arith.constant 5.500000e+01 : f32
    %75 = vector.broadcast %cst_54 : f32 to vector<32x1xf32>
    %76 = arith.mulf %75, %72 : vector<32x1xf32>
    %cst_55 = arith.constant 1.000000e+00 : f32
    %77 = vector.broadcast %cst_55 : f32 to vector<32x1xf32>
    %78 = arith.subf %77, %76 : vector<32x1xf32>
    %cst_56 = arith.constant 9.900000e+01 : f32
    %79 = vector.broadcast %cst_56 : f32 to vector<32x1xf32>
    %80 = arith.mulf %79, %73 : vector<32x1xf32>
    %81 = arith.addf %78, %80 : vector<32x1xf32>
    %cst_57 = arith.constant 4.500000e+01 : f32
    %82 = vector.broadcast %cst_57 : f32 to vector<32x1xf32>
    %83 = arith.mulf %82, %74 : vector<32x1xf32>
    %84 = arith.subf %81, %83 : vector<32x1xf32>
    %cst_58 = arith.constant 5.000000e+00 : f32
    %85 = vector.broadcast %cst_58 : f32 to vector<32x1xf32>
    %86 = arith.cmpf olt, %15, %85 : vector<32x1xf32>
    %87 = arith.extui %86 : vector<32x1xi1> to vector<32x1xi32>
    %88 = arith.sitofp %87 : vector<32x1xi32> to vector<32x1xf32>
    %89 = arith.mulf %84, %88 : vector<32x1xf32>
    %90 = arith.mulf %60, %58 : vector<32x32xf32>
    %91 = vector.broadcast %89 : vector<32x1xf32> to vector<32x32xf32>
    %92 = arith.mulf %66, %91 : vector<32x32xf32>
    %93 = arith.mulf %90, %92 : vector<32x32xf32>
    %c0_59 = arith.constant 0 : index
    %c0_60 = arith.constant 0 : index
    %94 = vector.load %arg17[%c0_59, %c0_60] : memref<32x64xf32, #tpu.memory_space<vmem>>, vector<32x64xf32>
    %cst_61 = arith.constant dense<0.000000e+00> : vector<32x64xf32>
    %95 = tpu.matmul %93, %94, %cst_61 {dimension_numbers = #tpu.dot_dimension_numbers<[1], [0], [0], [1], [0, 0, 1, 1], [], []>} : vector<32x32xf32>, vector<32x64xf32>, vector<32x64xf32> -> vector<32x64xf32>
    %c0_62 = arith.constant 0 : index
    %c0_63 = arith.constant 0 : index
    %96 = vector.load %arg18[%c0_62, %c0_63] : memref<1x64xf32, #tpu.memory_space<vmem>>, vector<1x64xf32>
    %97 = vector.broadcast %96 : vector<1x64xf32> to vector<32x64xf32>
    %98 = arith.addf %95, %97 : vector<32x64xf32>
    %99 = arith.negf %98 : vector<32x64xf32>
    %100 = math.exp %99 : vector<32x64xf32>
    %cst_64 = arith.constant 1.000000e+00 : f32
    %101 = vector.broadcast %cst_64 : f32 to vector<32x64xf32>
    %102 = arith.addf %101, %100 : vector<32x64xf32>
    %103 = arith.divf %101, %102 : vector<32x64xf32>
    %104 = arith.mulf %98, %103 : vector<32x64xf32>
    %c0_65 = arith.constant 0 : index
    %c0_66 = arith.constant 0 : index
    %105 = vector.load %arg19[%c0_65, %c0_66] : memref<64x33xf32, #tpu.memory_space<vmem>>, vector<64x33xf32>
    %cst_67 = arith.constant dense<0.000000e+00> : vector<32x33xf32>
    %106 = tpu.matmul %104, %105, %cst_67 {dimension_numbers = #tpu.dot_dimension_numbers<[1], [0], [0], [1], [0, 0, 1, 1], [], []>} : vector<32x64xf32>, vector<64x33xf32>, vector<32x33xf32> -> vector<32x33xf32>
    %c0_68 = arith.constant 0 : index
    %c0_69 = arith.constant 0 : index
    %107 = vector.load %arg20[%c0_68, %c0_69] : memref<1x33xf32, #tpu.memory_space<vmem>>, vector<1x33xf32>
    %108 = vector.broadcast %107 : vector<1x33xf32> to vector<32x33xf32>
    %109 = arith.addf %106, %108 : vector<32x33xf32>
    %110 = vector.extract_strided_slice %109 {offsets = [0, 0], sizes = [32, 32], strides = [1, 1]} : vector<32x33xf32> to vector<32x32xf32>
    %111 = vector.extract_strided_slice %109 {offsets = [0, 32], sizes = [32, 1], strides = [1, 1]} : vector<32x33xf32> to vector<32x1xf32>
    %112 = arith.addf %11, %111 : vector<32x1xf32>
    %c0_70 = arith.constant 0 : index
    %c0_71 = arith.constant 0 : index
    %c0_72 = arith.constant 0 : index
    %113 = vector.load %arg28[%c0_70, %c0_71, %c0_72] : memref<1x32x1xf32, #tpu.memory_space<vmem>>, vector<1x32x1xf32>
    %114 = vector.shape_cast %113 : vector<1x32x1xf32> to vector<32x1xf32>
    %115 = vector.shape_cast %112 : vector<32x1xf32> to vector<1x32x1xf32>
    tpu.vector_store %arg28[%c0_70, %c0_71, %c0_72], %115 {strides = array<i32>} : memref<1x32x1xf32, #tpu.memory_space<vmem>>, vector<1x32x1xf32>,
    %116 = vector.broadcast %111 : vector<32x1xf32> to vector<32x32xf32>
    %117 = arith.mulf %116, %110 : vector<32x32xf32>
    %118 = arith.addf %5, %117 : vector<32x32xf32>
    %c0_73 = arith.constant 0 : index
    %c0_74 = arith.constant 0 : index
    %c0_75 = arith.constant 0 : index
    %119 = vector.load %arg25[%c0_73, %c0_74, %c0_75] : memref<1x32x32xf32, #tpu.memory_space<vmem>>, vector<1x32x32xf32>
    %120 = vector.shape_cast %119 : vector<1x32x32xf32> to vector<32x32xf32>
    %121 = vector.shape_cast %118 : vector<32x32xf32> to vector<1x32x32xf32>
    tpu.vector_store %arg25[%c0_73, %c0_74, %c0_75], %121 {strides = array<i32>} : memref<1x32x32xf32, #tpu.memory_space<vmem>>, vector<1x32x32xf32>,
    %122 = arith.mulf %61, %59 : vector<32x32xf32>
    %cst_76 = arith.constant 0.000000e+00 : f32
    %123 = vector.broadcast %cst_76 : f32 to vector<32x1xf32>
    %124 = arith.cmpf oeq, %15, %123 : vector<32x1xf32>
    %125 = tpu.reciprocal %15 {approx = true} : vector<32x1xf32> -> vector<32x1xf32>
    %cst_77 = arith.constant 0.000000e+00 : f32
    %126 = vector.broadcast %cst_77 : f32 to vector<32x1xf32>
    %127 = arith.select %124, %126, %125 : vector<32x1xi1>, vector<32x1xf32>
    %128 = arith.subf %122, %118 : vector<32x32xf32>
    %129 = vector.broadcast %127 : vector<32x1xf32> to vector<32x32xf32>
    %130 = arith.mulf %129, %128 : vector<32x32xf32>
    %c0_78 = arith.constant 0 : index
    %c0_79 = arith.constant 0 : index
    %131 = vector.load %arg12[%c0_78, %c0_79] : memref<8x32xf32, #tpu.memory_space<vmem>>, vector<8x32xf32>
    %cst_80 = arith.constant dense<0.000000e+00> : vector<8x32xf32>
    %132 = tpu.matmul %131, %130, %cst_80 {dimension_numbers = #tpu.dot_dimension_numbers<[1], [0], [0], [1], [0, 0, 1, 1], [], []>} : vector<8x32xf32>, vector<32x32xf32>, vector<8x32xf32> -> vector<8x32xf32>
    %133 = arith.mulf %36, %132 : vector<8x32xf32>
    %134 = arith.addf %1, %133 : vector<8x32xf32>
    %c0_81 = arith.constant 0 : index
    %c0_82 = arith.constant 0 : index
    %c0_83 = arith.constant 0 : index
    %135 = vector.load %arg23[%c0_81, %c0_82, %c0_83] : memref<1x8x32xf32, #tpu.memory_space<vmem>>, vector<1x8x32xf32>
    %136 = vector.shape_cast %135 : vector<1x8x32xf32> to vector<8x32xf32>
    %137 = vector.shape_cast %134 : vector<8x32xf32> to vector<1x8x32xf32>
    tpu.vector_store %arg23[%c0_81, %c0_82, %c0_83], %137 {strides = array<i32>} : memref<1x8x32xf32, #tpu.memory_space<vmem>>, vector<1x8x32xf32>,
    %138 = arith.addf %7, %133 : vector<8x32xf32>
    %c0_84 = arith.constant 0 : index
    %c0_85 = arith.constant 0 : index
    %c0_86 = arith.constant 0 : index
    %139 = vector.load %arg26[%c0_84, %c0_85, %c0_86] : memref<1x8x32xf32, #tpu.memory_space<vmem>>, vector<1x8x32xf32>
    %140 = vector.shape_cast %139 : vector<1x8x32xf32> to vector<8x32xf32>
    %141 = vector.shape_cast %138 : vector<8x32xf32> to vector<1x8x32xf32>
    tpu.vector_store %arg26[%c0_84, %c0_85, %c0_86], %141 {strides = array<i32>} : memref<1x8x32xf32, #tpu.memory_space<vmem>>, vector<1x8x32xf32>,
    return
  }
  func.func @transform_0(%arg0: i32) -> (i32, i32, i32) {
    %c0_i32 = arith.constant 0 : i32
    %c0_i32_0 = arith.constant 0 : i32
    %c0_i32_1 = arith.constant 0 : i32
    return %arg0, %c0_i32, %c0_i32_0 : i32, i32, i32
  }
  func.func @transform_1(%arg0: i32) -> (i32, i32, i32) {
    %c0_i32 = arith.constant 0 : i32
    %c0_i32_0 = arith.constant 0 : i32
    %c0_i32_1 = arith.constant 0 : i32
    return %arg0, %c0_i32, %c0_i32_0 : i32, i32, i32
  }
  func.func @transform_2(%arg0: i32) -> (i32, i32, i32) {
    %c0_i32 = arith.constant 0 : i32
    %c0_i32_0 = arith.constant 0 : i32
    %c0_i32_1 = arith.constant 0 : i32
    return %arg0, %c0_i32, %c0_i32_0 : i32, i32, i32
  }
  func.func @transform_3(%arg0: i32) -> (i32, i32, i32) {
    %c0_i32 = arith.constant 0 : i32
    %c0_i32_0 = arith.constant 0 : i32
    %c0_i32_1 = arith.constant 0 : i32
    return %arg0, %c0_i32, %c0_i32_0 : i32, i32, i32
  }
  func.func @transform_4(%arg0: i32) -> (i32, i32, i32) {
    %c0_i32 = arith.constant 0 : i32
    %c0_i32_0 = arith.constant 0 : i32
    %c0_i32_1 = arith.constant 0 : i32
    return %arg0, %c0_i32, %c0_i32_0 : i32, i32, i32
  }
  func.func @transform_5(%arg0: i32) -> (i32, i32, i32) {
    %c0_i32 = arith.constant 0 : i32
    %c0_i32_0 = arith.constant 0 : i32
    %c0_i32_1 = arith.constant 0 : i32
    return %arg0, %c0_i32, %c0_i32_0 : i32, i32, i32
  }
  func.func @transform_6(%arg0: i32) -> (i32, i32, i32) {
    %c0_i32 = arith.constant 0 : i32
    %c0_i32_0 = arith.constant 0 : i32
    %c0_i32_1 = arith.constant 0 : i32
    return %arg0, %c0_i32, %c0_i32_0 : i32, i32, i32
  }
  func.func @transform_7(%arg0: i32) -> (i32, i32, i32) {
    %c0_i32 = arith.constant 0 : i32
    %c0_i32_0 = arith.constant 0 : i32
    %c0_i32_1 = arith.constant 0 : i32
    return %arg0, %c0_i32, %c0_i32_0 : i32, i32, i32
  }
  func.func @transform_8(%arg0: i32) -> (i32, i32, i32) {
    %c0_i32 = arith.constant 0 : i32
    %c0_i32_0 = arith.constant 0 : i32
    %c0_i32_1 = arith.constant 0 : i32
    return %arg0, %c0_i32, %c0_i32_0 : i32, i32, i32
  }
  func.func @transform_9(%arg0: i32) -> (i32, i32) {
    %c0_i32 = arith.constant 0 : i32
    %c0_i32_0 = arith.constant 0 : i32
    %c0_i32_1 = arith.constant 0 : i32
    return %c0_i32, %c0_i32_0 : i32, i32
  }
  func.func @transform_10(%arg0: i32) -> (i32, i32) {
    %c0_i32 = arith.constant 0 : i32
    %c0_i32_0 = arith.constant 0 : i32
    %c0_i32_1 = arith.constant 0 : i32
    return %c0_i32, %c0_i32_0 : i32, i32
  }
  func.func @transform_11(%arg0: i32) -> (i32, i32) {
    %c0_i32 = arith.constant 0 : i32
    %c0_i32_0 = arith.constant 0 : i32
    %c0_i32_1 = arith.constant 0 : i32
    return %c0_i32, %c0_i32_0 : i32, i32
  }
  func.func @transform_12(%arg0: i32) -> (i32, i32) {
    %c0_i32 = arith.constant 0 : i32
    %c0_i32_0 = arith.constant 0 : i32
    %c0_i32_1 = arith.constant 0 : i32
    return %c0_i32, %c0_i32_0 : i32, i32
  }
  func.func @transform_13(%arg0: i32) -> (i32, i32) {
    %c0_i32 = arith.constant 0 : i32
    %c0_i32_0 = arith.constant 0 : i32
    %c0_i32_1 = arith.constant 0 : i32
    return %c0_i32, %c0_i32_0 : i32, i32
  }
  func.func @transform_14(%arg0: i32) -> (i32, i32) {
    %c0_i32 = arith.constant 0 : i32
    %c0_i32_0 = arith.constant 0 : i32
    %c0_i32_1 = arith.constant 0 : i32
    return %c0_i32, %c0_i32_0 : i32, i32
  }
  func.func @transform_15(%arg0: i32) -> (i32, i32) {
    %c0_i32 = arith.constant 0 : i32
    %c0_i32_0 = arith.constant 0 : i32
    %c0_i32_1 = arith.constant 0 : i32
    return %c0_i32, %c0_i32_0 : i32, i32
  }
  func.func @transform_16(%arg0: i32) -> (i32, i32) {
    %c0_i32 = arith.constant 0 : i32
    %c0_i32_0 = arith.constant 0 : i32
    %c0_i32_1 = arith.constant 0 : i32
    return %c0_i32, %c0_i32_0 : i32, i32
  }
  func.func @transform_17(%arg0: i32) -> (i32, i32) {
    %c0_i32 = arith.constant 0 : i32
    %c0_i32_0 = arith.constant 0 : i32
    %c0_i32_1 = arith.constant 0 : i32
    return %c0_i32, %c0_i32_0 : i32, i32
  }
  func.func @transform_18(%arg0: i32) -> (i32, i32) {
    %c0_i32 = arith.constant 0 : i32
    %c0_i32_0 = arith.constant 0 : i32
    %c0_i32_1 = arith.constant 0 : i32
    return %c0_i32, %c0_i32_0 : i32, i32
  }
  func.func @transform_19(%arg0: i32) -> (i32, i32) {
    %c0_i32 = arith.constant 0 : i32
    %c0_i32_0 = arith.constant 0 : i32
    %c0_i32_1 = arith.constant 0 : i32
    return %c0_i32, %c0_i32_0 : i32, i32
  }
  func.func @transform_20(%arg0: i32) -> (i32, i32) {
    %c0_i32 = arith.constant 0 : i32
    %c0_i32_0 = arith.constant 0 : i32
    %c0_i32_1 = arith.constant 0 : i32
    return %c0_i32, %c0_i32_0 : i32, i32
  }
  func.func @transform_21(%arg0: i32) -> (i32, i32) {
    %c0_i32 = arith.constant 0 : i32
    %c0_i32_0 = arith.constant 0 : i32
    %c0_i32_1 = arith.constant 0 : i32
    return %c0_i32, %c0_i32_0 : i32, i32
  }
  func.func @transform_22(%arg0: i32) -> (i32, i32, i32) {
    %c0_i32 = arith.constant 0 : i32
    %c0_i32_0 = arith.constant 0 : i32
    %c0_i32_1 = arith.constant 0 : i32
    return %arg0, %c0_i32, %c0_i32_0 : i32, i32, i32
  }
  func.func @transform_23(%arg0: i32) -> (i32, i32, i32) {
    %c0_i32 = arith.constant 0 : i32
    %c0_i32_0 = arith.constant 0 : i32
    %c0_i32_1 = arith.constant 0 : i32
    return %arg0, %c0_i32, %c0_i32_0 : i32, i32, i32
  }
  func.func @transform_24(%arg0: i32) -> (i32, i32, i32) {
    %c0_i32 = arith.constant 0 : i32
    %c0_i32_0 = arith.constant 0 : i32
    %c0_i32_1 = arith.constant 0 : i32
    return %arg0, %c0_i32, %c0_i32_0 : i32, i32, i32
  }
  func.func @transform_25(%arg0: i32) -> (i32, i32, i32) {
    %c0_i32 = arith.constant 0 : i32
    %c0_i32_0 = arith.constant 0 : i32
    %c0_i32_1 = arith.constant 0 : i32
    return %arg0, %c0_i32, %c0_i32_0 : i32, i32, i32
  }
  func.func @transform_26(%arg0: i32) -> (i32, i32, i32) {
    %c0_i32 = arith.constant 0 : i32
    %c0_i32_0 = arith.constant 0 : i32
    %c0_i32_1 = arith.constant 0 : i32
    return %arg0, %c0_i32, %c0_i32_0 : i32, i32, i32
  }
  func.func @transform_27(%arg0: i32) -> (i32, i32, i32) {
    %c0_i32 = arith.constant 0 : i32
    %c0_i32_0 = arith.constant 0 : i32
    %c0_i32_1 = arith.constant 0 : i32
    return %arg0, %c0_i32, %c0_i32_0 : i32, i32, i32
  }
}

</mosaic_0001>

<llo_original>
// kernel: tpu_custom_call.1
$region0: #{tpu_custom_call.1}
  #allocation0 [shape = 'u32[]', space=smem, size = 0x4, offset = 0x4, fixed_abs, tag = 'smem constant byte address 0x4 - core index']
  #allocation1 [shape = 'u32[144,128]{1,0:T(1,128)}', space=vmem, size = 0x12000, scoped, tag = 'internal scratch']
  %s0 = inlined_call_operand.vmem [shape: f32[2,8,32], index: 0, kind: input, shape index: {}]
  %s1 = inlined_call_operand.vmem [shape: f32[2,8,32], index: 1, kind: input, shape index: {}]
  %s2 = inlined_call_operand.vmem [shape: f32[2,32,32], index: 2, kind: input, shape index: {}]
  %s3 = inlined_call_operand.vmem [shape: f32[2,8,32], index: 3, kind: input, shape index: {}]
  %s4 = inlined_call_operand.vmem [shape: f32[2,8,1], index: 4, kind: input, shape index: {}]
  %s5 = inlined_call_operand.vmem [shape: f32[2,32,1], index: 5, kind: input, shape index: {}]
  %s6 = inlined_call_operand.vmem [shape: f32[2,32,16], index: 6, kind: input, shape index: {}]
  %s7 = inlined_call_operand.vmem [shape: f32[2,32,1], index: 7, kind: input, shape index: {}]
  %s8 = inlined_call_operand.vmem [shape: s32[2,32,1], index: 8, kind: input, shape index: {}]
  %s9 = inlined_call_operand.vmem [shape: s32[1,8], index: 9, kind: input, shape index: {}]
  %s10 = inlined_call_operand.vmem [shape: f32[32,8], index: 10, kind: input, shape index: {}]
  %s11 = inlined_call_operand.vmem [shape: f32[8,32], index: 11, kind: input, shape index: {}]
  %s12 = inlined_call_operand.vmem [shape: f32[32,128], index: 12, kind: input, shape index: {}]
  %s13 = inlined_call_operand.vmem [shape: f32[1,128], index: 13, kind: input, shape index: {}]
  %s14 = inlined_call_operand.vmem [shape: f32[128,97], index: 14, kind: input, shape index: {}]
  %s15 = inlined_call_operand.vmem [shape: f32[1,97], index: 15, kind: input, shape index: {}]
  %s16 = inlined_call_operand.vmem [shape: f32[32,64], index: 16, kind: input, shape index: {}]
  %s17 = inlined_call_operand.vmem [shape: f32[1,64], index: 17, kind: input, shape index: {}]
  %s18 = inlined_call_operand.vmem [shape: f32[64,33], index: 18, kind: input, shape index: {}]
  %s19 = inlined_call_operand.vmem [shape: f32[1,33], index: 19, kind: input, shape index: {}]
  %s20 = inlined_call_operand.vmem [shape: f32[16,32], index: 20, kind: input, shape index: {}]
  %s21 = inlined_call_operand.vmem [shape: f32[1,32], index: 21, kind: input, shape index: {}]
  %s22 = inlined_call_operand.hbm [shape: f32[2,8,32], index: 22, kind: output, shape index: {0}]
  %s23 = inlined_call_operand.hbm [shape: f32[2,8,32], index: 23, kind: output, shape index: {1}]
  %s24 = inlined_call_operand.hbm [shape: f32[2,32,32], index: 24, kind: output, shape index: {2}]
  %s25 = inlined_call_operand.hbm [shape: f32[2,8,32], index: 25, kind: output, shape index: {3}]
  %s26 = inlined_call_operand.vmem [shape: f32[2,8,1], index: 26, kind: output, shape index: {4}]
  %s27 = inlined_call_operand.vmem [shape: f32[2,32,1], index: 27, kind: output, shape index: {5}]
  %28 = xla_tuple %s22, %s23, %s24, %s25, %s26, %s27
  %s29 = sld [smem:[#allocation0]]
  $region161: #{tpu_custom_call.1} parent=0
    _
  %s31 = ssub.s32 1, %s29
  %s32 = scalar_select 0, %s31, %s29
  $region1: #{tpu_custom_call.1} parent=0
    #allocation2 [shape = 'u8[8192]{0}', space=vmem, size = 0x2000, scoped, tag = 'output window, operand 0']
    #allocation3 [shape = 's32[2]{0}', space=sflag, size = 0x8, scoped, tag = 'scoped memory for tpu_custom_call.1']
    #allocation4 [shape = 'u8[8192]{0}', space=vmem, size = 0x2000, scoped, tag = 'output window, operand 1']
    #allocation5 [shape = 's32[2]{0}', space=sflag, size = 0x8, scoped, tag = 'scoped memory for tpu_custom_call.1']
    #allocation6 [shape = 'u8[32768]{0}', space=vmem, size = 0x8000, scoped, tag = 'output window, operand 2']
    #allocation7 [shape = 'u8[8192]{0}', space=vmem, size = 0x2000, scoped, tag = 'output window, operand 3']
    #allocation8 [shape = 's32[2]{0}', space=sflag, size = 0x8, scoped, tag = 'scoped memory for tpu_custom_call.1']
    %33 = vsyncpa [#allocation3], 0
    %s34 = scalar_lea.sflag [#allocation3], 1
    %35 = vsyncpa %s34, 0
    %36 = vsyncpa [#allocation5], 0
    %s37 = scalar_lea.sflag [#allocation5], 1
    %38 = vsyncpa %s37, 0
    %39 = vsyncpa [#allocation8], 0
    %s40 = scalar_lea.sflag [#allocation8], 1
    %41 = vsyncpa %s40, 0
    loop: start=0, step=1, limit=4
    $region2: #{tpu_custom_call.1} parent=1 // loop_pre_header
      _
    $region3: #{tpu_custom_call.1} parent=1 // loop_header
      %s43 = sphi 0, %s47
      %p44 = scmp.ge.s32.totalorder %s43, 4
      %s53 = sphi 0, %s55
      %s56 = sphi 0, %s53
      %s57 = sphi 0, %s56
      %s73 = sphi 0, %s57
      %s79 = sphi 0, %s81
      %s82 = sphi 0, %s79
      %s83 = sphi 0, %s82
      %s99 = sphi 0, %s83
      %s105 = sphi 0, %s107
      %s108 = sphi 0, %s105
      %s109 = sphi 0, %s108
      %s125 = sphi 0, %s109
      %s131 = sphi 0, %s133
      %s134 = sphi 0, %s131
      %s135 = sphi 0, %s134
      %s151 = sphi 0, %s135
      %s157 = sphi 0, %s159
      %s160 = sphi 0, %s157
      %s161 = sphi 0, %s160
      %s177 = sphi 0, %s161
      %s183 = sphi 0, %s185
      %s186 = sphi 0, %s183
      %s187 = sphi 0, %s186
      %s203 = sphi 0, %s187
      %s209 = sphi 0, %s211
      %s212 = sphi 0, %s209
      %s213 = sphi 0, %s212
      %s229 = sphi 0, %s213
      %s235 = sphi 0, %s237
      %s238 = sphi 0, %s235
      %s239 = sphi 0, %s238
      %s255 = sphi 0, %s239
      %s261 = sphi 0, %s263
      %s264 = sphi 0, %s261
      %s265 = sphi 0, %s264
      %s281 = sphi 0, %s265
      %s285 = sphi 0, %s285
      %s287 = sphi 0, %s285
      %s288 = sphi 0, %s287
      %s302 = sphi 0, %s288
      %s306 = sphi 0, %s306
      %s308 = sphi 0, %s306
      %s309 = sphi 0, %s308
      %s323 = sphi 0, %s309
      %s327 = sphi 0, %s327
      %s329 = sphi 0, %s327
      %s330 = sphi 0, %s329
      %s344 = sphi 0, %s330
      %s348 = sphi 0, %s348
      %s350 = sphi 0, %s348
      %s351 = sphi 0, %s350
      %s365 = sphi 0, %s351
      %s369 = sphi 0, %s369
      %s371 = sphi 0, %s369
      %s372 = sphi 0, %s371
      %s386 = sphi 0, %s372
      %s390 = sphi 0, %s390
      %s392 = sphi 0, %s390
      %s393 = sphi 0, %s392
      %s407 = sphi 0, %s393
      %s411 = sphi 0, %s411
      %s413 = sphi 0, %s411
      %s414 = sphi 0, %s413
      %s428 = sphi 0, %s414
      %s432 = sphi 0, %s432
      %s434 = sphi 0, %s432
      %s435 = sphi 0, %s434
      %s449 = sphi 0, %s435
      %s453 = sphi 0, %s453
      %s455 = sphi 0, %s453
      %s456 = sphi 0, %s455
      %s470 = sphi 0, %s456
      %s474 = sphi 0, %s474
      %s476 = sphi 0, %s474
      %s477 = sphi 0, %s476
      %s491 = sphi 0, %s477
      %s495 = sphi 0, %s495
      %s497 = sphi 0, %s495
      %s498 = sphi 0, %s497
      %s512 = sphi 0, %s498
      %s516 = sphi 0, %s516
      %s518 = sphi 0, %s516
      %s519 = sphi 0, %s518
      %s533 = sphi 0, %s519
      %s537 = sphi 0, %s537
      %s539 = sphi 0, %s537
      %s540 = sphi 0, %s539
      %s554 = sphi 0, %s540
      %s560 = sphi 0, %s562
      %s563 = sphi 0, %s560
      %s564 = sphi 0, %s563
      %s580 = sphi 0, %s564
      %s586 = sphi 0, %s588
      %s589 = sphi 0, %s586
      %s590 = sphi 0, %s589
      %s606 = sphi 0, %s590
      %s612 = sphi 0, %s614
      %s615 = sphi 0, %s612
      %s616 = sphi 0, %s615
      %s632 = sphi 0, %s616
      %s638 = sphi 0, %s640
      %s641 = sphi 0, %s638
      %s642 = sphi 0, %s641
      %s658 = sphi 0, %s642
      %s664 = sphi 0, %s666
      %s667 = sphi 0, %s664
      %s668 = sphi 0, %s667
      %s684 = sphi 0, %s668
      %s690 = sphi 0, %s692
      %s693 = sphi 0, %s690
      %s694 = sphi 0, %s693
      %s710 = sphi 0, %s694
    $region4: #{tpu_custom_call.1} parent=1 // loop_header_branch
      %46 = sbr.rel (%p44) target = $region8
    $region5: #{tpu_custom_call.1} parent=1 // loop_body
      %s48 = ssub.s32 %s43, 1
      %s49 = ssub.s32 %s43, 2
      %s50 = sadd.s32 %s43, 1
      %s51 = ssub.s32 %s43, %s50
      %p52 = scmp.eq.s32.totalorder %s51, 0
      %s54 = sadd.s32 %s53, 1
      %s55 = scalar_select %p52, %s53, %s54
      %p58 = pneg %p52
      %p59 = scmp.eq.s32.totalorder %s43, 1
      %p60 = por %p58, %p59
      %p61 = scmp.ne.s32.totalorder %s53, %s56
      %p62 = scmp.eq.s32.totalorder %s43, 0
      %p63 = por %p61, %p62
      %p64 = scmp.ne.s32.totalorder %s53, %s56
      %p65 = scmp.eq.s32.totalorder %s48, 1
      %p66 = por %p64, %p65
      %p67 = scmp.ne.s32.totalorder %s56, %s57
      %p68 = scmp.eq.s32.totalorder %s48, 0
      %p69 = por %p67, %p68
      %p70 = scmp.ne.s32.totalorder %s56, %s57
      %p71 = scmp.eq.s32.totalorder %s49, 1
      %p72 = por %p70, %p71
      %p74 = scmp.ne.s32.totalorder %s57, %s73
      %p75 = scmp.eq.s32.totalorder %s49, 0
      %p76 = por %p74, %p75
      %s77 = ssub.s32 %s43, %s50
      %p78 = scmp.eq.s32.totalorder %s77, 0
      %s80 = sadd.s32 %s79, 1
      %s81 = scalar_select %p78, %s79, %s80
      %p84 = pneg %p78
      %p85 = scmp.eq.s32.totalorder %s43, 1
      %p86 = por %p84, %p85
      %p87 = scmp.ne.s32.totalorder %s79, %s82
      %p88 = scmp.eq.s32.totalorder %s43, 0
      %p89 = por %p87, %p88
      %p90 = scmp.ne.s32.totalorder %s79, %s82
      %p91 = scmp.eq.s32.totalorder %s48, 1
      %p92 = por %p90, %p91
      %p93 = scmp.ne.s32.totalorder %s82, %s83
      %p94 = scmp.eq.s32.totalorder %s48, 0
      %p95 = por %p93, %p94
      %p96 = scmp.ne.s32.totalorder %s82, %s83
      %p97 = scmp.eq.s32.totalorder %s49, 1
      %p98 = por %p96, %p97
      %p100 = scmp.ne.s32.totalorder %s83, %s99
      %p101 = scmp.eq.s32.totalorder %s49, 0
      %p102 = por %p100, %p101
      %s103 = ssub.s32 %s43, %s50
      %p104 = scmp.eq.s32.totalorder %s103, 0
      %s106 = sadd.s32 %s105, 1
      %s107 = scalar_select %p104, %s105, %s106
      %p110 = pneg %p104
      %p111 = scmp.eq.s32.totalorder %s43, 1
      %p112 = por %p110, %p111
      %p113 = scmp.ne.s32.totalorder %s105, %s108
      %p114 = scmp.eq.s32.totalorder %s43, 0
      %p115 = por %p113, %p114
      %p116 = scmp.ne.s32.totalorder %s105, %s108
      %p117 = scmp.eq.s32.totalorder %s48, 1
      %p118 = por %p116, %p117
      %p119 = scmp.ne.s32.totalorder %s108, %s109
      %p120 = scmp.eq.s32.totalorder %s48, 0
      %p121 = por %p119, %p120
      %p122 = scmp.ne.s32.totalorder %s108, %s109
      %p123 = scmp.eq.s32.totalorder %s49, 1
      %p124 = por %p122, %p123
      %p126 = scmp.ne.s32.totalorder %s109, %s125
      %p127 = scmp.eq.s32.totalorder %s49, 0
      %p128 = por %p126, %p127
      %s129 = ssub.s32 %s43, %s50
      %p130 = scmp.eq.s32.totalorder %s129, 0
      %s132 = sadd.s32 %s131, 1
      %s133 = scalar_select %p130, %s131, %s132
      %p136 = pneg %p130
      %p137 = scmp.eq.s32.totalorder %s43, 1
      %p138 = por %p136, %p137
      %p139 = scmp.ne.s32.totalorder %s131, %s134
      %p140 = scmp.eq.s32.totalorder %s43, 0
      %p141 = por %p139, %p140
      %p142 = scmp.ne.s32.totalorder %s131, %s134
      %p143 = scmp.eq.s32.totalorder %s48, 1
      %p144 = por %p142, %p143
      %p145 = scmp.ne.s32.totalorder %s134, %s135
      %p146 = scmp.eq.s32.totalorder %s48, 0
      %p147 = por %p145, %p146
      %p148 = scmp.ne.s32.totalorder %s134, %s135
      %p149 = scmp.eq.s32.totalorder %s49, 1
      %p150 = por %p148, %p149
      %p152 = scmp.ne.s32.totalorder %s135, %s151
      %p153 = scmp.eq.s32.totalorder %s49, 0
      %p154 = por %p152, %p153
      %s155 = ssub.s32 %s43, %s50
      %p156 = scmp.eq.s32.totalorder %s155, 0
      %s158 = sadd.s32 %s157, 1
      %s159 = scalar_select %p156, %s157, %s158
      %p162 = pneg %p156
      %p163 = scmp.eq.s32.totalorder %s43, 1
      %p164 = por %p162, %p163
      %p165 = scmp.ne.s32.totalorder %s157, %s160
      %p166 = scmp.eq.s32.totalorder %s43, 0
      %p167 = por %p165, %p166
      %p168 = scmp.ne.s32.totalorder %s157, %s160
      %p169 = scmp.eq.s32.totalorder %s48, 1
      %p170 = por %p168, %p169
      %p171 = scmp.ne.s32.totalorder %s160, %s161
      %p172 = scmp.eq.s32.totalorder %s48, 0
      %p173 = por %p171, %p172
      %p174 = scmp.ne.s32.totalorder %s160, %s161
      %p175 = scmp.eq.s32.totalorder %s49, 1
      %p176 = por %p174, %p175
      %p178 = scmp.ne.s32.totalorder %s161, %s177
      %p179 = scmp.eq.s32.totalorder %s49, 0
      %p180 = por %p178, %p179
      %s181 = ssub.s32 %s43, %s50
      %p182 = scmp.eq.s32.totalorder %s181, 0
      %s184 = sadd.s32 %s183, 1
      %s185 = scalar_select %p182, %s183, %s184
      %p188 = pneg %p182
      %p189 = scmp.eq.s32.totalorder %s43, 1
      %p190 = por %p188, %p189
      %p191 = scmp.ne.s32.totalorder %s183, %s186
      %p192 = scmp.eq.s32.totalorder %s43, 0
      %p193 = por %p191, %p192
      %p194 = scmp.ne.s32.totalorder %s183, %s186
      %p195 = scmp.eq.s32.totalorder %s48, 1
      %p196 = por %p194, %p195
      %p197 = scmp.ne.s32.totalorder %s186, %s187
      %p198 = scmp.eq.s32.totalorder %s48, 0
      %p199 = por %p197, %p198
      %p200 = scmp.ne.s32.totalorder %s186, %s187
      %p201 = scmp.eq.s32.totalorder %s49, 1
      %p202 = por %p200, %p201
      %p204 = scmp.ne.s32.totalorder %s187, %s203
      %p205 = scmp.eq.s32.totalorder %s49, 0
      %p206 = por %p204, %p205
      %s207 = ssub.s32 %s43, %s50
      %p208 = scmp.eq.s32.totalorder %s207, 0
      %s210 = sadd.s32 %s209, 1
      %s211 = scalar_select %p208, %s209, %s210
      %p214 = pneg %p208
      %p215 = scmp.eq.s32.totalorder %s43, 1
      %p216 = por %p214, %p215
      %p217 = scmp.ne.s32.totalorder %s209, %s212
      %p218 = scmp.eq.s32.totalorder %s43, 0
      %p219 = por %p217, %p218
      %p220 = scmp.ne.s32.totalorder %s209, %s212
      %p221 = scmp.eq.s32.totalorder %s48, 1
      %p222 = por %p220, %p221
      %p223 = scmp.ne.s32.totalorder %s212, %s213
      %p224 = scmp.eq.s32.totalorder %s48, 0
      %p225 = por %p223, %p224
      %p226 = scmp.ne.s32.totalorder %s212, %s213
      %p227 = scmp.eq.s32.totalorder %s49, 1
      %p228 = por %p226, %p227
      %p230 = scmp.ne.s32.totalorder %s213, %s229
      %p231 = scmp.eq.s32.totalorder %s49, 0
      %p232 = por %p230, %p231
      %s233 = ssub.s32 %s43, %s50
      %p234 = scmp.eq.s32.totalorder %s233, 0
      %s236 = sadd.s32 %s235, 1
      %s237 = scalar_select %p234, %s235, %s236
      %p240 = pneg %p234
      %p241 = scmp.eq.s32.totalorder %s43, 1
      %p242 = por %p240, %p241
      %p243 = scmp.ne.s32.totalorder %s235, %s238
      %p244 = scmp.eq.s32.totalorder %s43, 0
      %p245 = por %p243, %p244
      %p246 = scmp.ne.s32.totalorder %s235, %s238
      %p247 = scmp.eq.s32.totalorder %s48, 1
      %p248 = por %p246, %p247
      %p249 = scmp.ne.s32.totalorder %s238, %s239
      %p250 = scmp.eq.s32.totalorder %s48, 0
      %p251 = por %p249, %p250
      %p252 = scmp.ne.s32.totalorder %s238, %s239
      %p253 = scmp.eq.s32.totalorder %s49, 1
      %p254 = por %p252, %p253
      %p256 = scmp.ne.s32.totalorder %s239, %s255
      %p257 = scmp.eq.s32.totalorder %s49, 0
      %p258 = por %p256, %p257
      %s259 = ssub.s32 %s43, %s50
      %p260 = scmp.eq.s32.totalorder %s259, 0
      %s262 = sadd.s32 %s261, 1
      %s263 = scalar_select %p260, %s261, %s262
      %p266 = pneg %p260
      %p267 = scmp.eq.s32.totalorder %s43, 1
      %p268 = por %p266, %p267
      %p269 = scmp.ne.s32.totalorder %s261, %s264
      %p270 = scmp.eq.s32.totalorder %s43, 0
      %p271 = por %p269, %p270
      %p272 = scmp.ne.s32.totalorder %s261, %s264
      %p273 = scmp.eq.s32.totalorder %s48, 1
      %p274 = por %p272, %p273
      %p275 = scmp.ne.s32.totalorder %s264, %s265
      %p276 = scmp.eq.s32.totalorder %s48, 0
      %p277 = por %p275, %p276
      %p278 = scmp.ne.s32.totalorder %s264, %s265
      %p279 = scmp.eq.s32.totalorder %s49, 1
      %p280 = por %p278, %p279
      %p282 = scmp.ne.s32.totalorder %s265, %s281
      %p283 = scmp.eq.s32.totalorder %s49, 0
      %p284 = por %p282, %p283
      %s286 = sadd.s32 %s285, 1
      %p289 = scmp.eq.s32.totalorder %s43, 1
      %p290 = scmp.ne.s32.totalorder %s285, %s287
      %p291 = scmp.eq.s32.totalorder %s43, 0
      %p292 = por %p290, %p291
      %p293 = scmp.ne.s32.totalorder %s285, %s287
      %p294 = scmp.eq.s32.totalorder %s48, 1
      %p295 = por %p293, %p294
      %p296 = scmp.ne.s32.totalorder %s287, %s288
      %p297 = scmp.eq.s32.totalorder %s48, 0
      %p298 = por %p296, %p297
      %p299 = scmp.ne.s32.totalorder %s287, %s288
      %p300 = scmp.eq.s32.totalorder %s49, 1
      %p301 = por %p299, %p300
      %p303 = scmp.ne.s32.totalorder %s288, %s302
      %p304 = scmp.eq.s32.totalorder %s49, 0
      %p305 = por %p303, %p304
      %s307 = sadd.s32 %s306, 1
      %p310 = scmp.eq.s32.totalorder %s43, 1
      %p311 = scmp.ne.s32.totalorder %s306, %s308
      %p312 = scmp.eq.s32.totalorder %s43, 0
      %p313 = por %p311, %p312
      %p314 = scmp.ne.s32.totalorder %s306, %s308
      %p315 = scmp.eq.s32.totalorder %s48, 1
      %p316 = por %p314, %p315
      %p317 = scmp.ne.s32.totalorder %s308, %s309
      %p318 = scmp.eq.s32.totalorder %s48, 0
      %p319 = por %p317, %p318
      %p320 = scmp.ne.s32.totalorder %s308, %s309
      %p321 = scmp.eq.s32.totalorder %s49, 1
      %p322 = por %p320, %p321
      %p324 = scmp.ne.s32.totalorder %s309, %s323
      %p325 = scmp.eq.s32.totalorder %s49, 0
      %p326 = por %p324, %p325
      %s328 = sadd.s32 %s327, 1
      %p331 = scmp.eq.s32.totalorder %s43, 1
      %p332 = scmp.ne.s32.totalorder %s327, %s329
      %p333 = scmp.eq.s32.totalorder %s43, 0
      %p334 = por %p332, %p333
      %p335 = scmp.ne.s32.totalorder %s327, %s329
      %p336 = scmp.eq.s32.totalorder %s48, 1
      %p337 = por %p335, %p336
      %p338 = scmp.ne.s32.totalorder %s329, %s330
      %p339 = scmp.eq.s32.totalorder %s48, 0
      %p340 = por %p338, %p339
      %p341 = scmp.ne.s32.totalorder %s329, %s330
      %p342 = scmp.eq.s32.totalorder %s49, 1
      %p343 = por %p341, %p342
      %p345 = scmp.ne.s32.totalorder %s330, %s344
      %p346 = scmp.eq.s32.totalorder %s49, 0
      %p347 = por %p345, %p346
      %s349 = sadd.s32 %s348, 1
      %p352 = scmp.eq.s32.totalorder %s43, 1
      %p353 = scmp.ne.s32.totalorder %s348, %s350
      %p354 = scmp.eq.s32.totalorder %s43, 0
      %p355 = por %p353, %p354
      %p356 = scmp.ne.s32.totalorder %s348, %s350
      %p357 = scmp.eq.s32.totalorder %s48, 1
      %p358 = por %p356, %p357
      %p359 = scmp.ne.s32.totalorder %s350, %s351
      %p360 = scmp.eq.s32.totalorder %s48, 0
      %p361 = por %p359, %p360
      %p362 = scmp.ne.s32.totalorder %s350, %s351
      %p363 = scmp.eq.s32.totalorder %s49, 1
      %p364 = por %p362, %p363
      %p366 = scmp.ne.s32.totalorder %s351, %s365
      %p367 = scmp.eq.s32.totalorder %s49, 0
      %p368 = por %p366, %p367
      %s370 = sadd.s32 %s369, 1
      %p373 = scmp.eq.s32.totalorder %s43, 1
      %p374 = scmp.ne.s32.totalorder %s369, %s371
      %p375 = scmp.eq.s32.totalorder %s43, 0
      %p376 = por %p374, %p375
      %p377 = scmp.ne.s32.totalorder %s369, %s371
      %p378 = scmp.eq.s32.totalorder %s48, 1
      %p379 = por %p377, %p378
      %p380 = scmp.ne.s32.totalorder %s371, %s372
      %p381 = scmp.eq.s32.totalorder %s48, 0
      %p382 = por %p380, %p381
      %p383 = scmp.ne.s32.totalorder %s371, %s372
      %p384 = scmp.eq.s32.totalorder %s49, 1
      %p385 = por %p383, %p384
      %p387 = scmp.ne.s32.totalorder %s372, %s386
      %p388 = scmp.eq.s32.totalorder %s49, 0
      %p389 = por %p387, %p388
      %s391 = sadd.s32 %s390, 1
      %p394 = scmp.eq.s32.totalorder %s43, 1
      %p395 = scmp.ne.s32.totalorder %s390, %s392
      %p396 = scmp.eq.s32.totalorder %s43, 0
      %p397 = por %p395, %p396
      %p398 = scmp.ne.s32.totalorder %s390, %s392
      %p399 = scmp.eq.s32.totalorder %s48, 1
      %p400 = por %p398, %p399
      %p401 = scmp.ne.s32.totalorder %s392, %s393
      %p402 = scmp.eq.s32.totalorder %s48, 0
      %p403 = por %p401, %p402
      %p404 = scmp.ne.s32.totalorder %s392, %s393
      %p405 = scmp.eq.s32.totalorder %s49, 1
      %p406 = por %p404, %p405
      %p408 = scmp.ne.s32.totalorder %s393, %s407
      %p409 = scmp.eq.s32.totalorder %s49, 0
      %p410 = por %p408, %p409
      %s412 = sadd.s32 %s411, 1
      %p415 = scmp.eq.s32.totalorder %s43, 1
      %p416 = scmp.ne.s32.totalorder %s411, %s413
      %p417 = scmp.eq.s32.totalorder %s43, 0
      %p418 = por %p416, %p417
      %p419 = scmp.ne.s32.totalorder %s411, %s413
      %p420 = scmp.eq.s32.totalorder %s48, 1
      %p421 = por %p419, %p420
      %p422 = scmp.ne.s32.totalorder %s413, %s414
      %p423 = scmp.eq.s32.totalorder %s48, 0
      %p424 = por %p422, %p423
      %p425 = scmp.ne.s32.totalorder %s413, %s414
      %p426 = scmp.eq.s32.totalorder %s49, 1
      %p427 = por %p425, %p426
      %p429 = scmp.ne.s32.totalorder %s414, %s428
      %p430 = scmp.eq.s32.totalorder %s49, 0
      %p431 = por %p429, %p430
      %s433 = sadd.s32 %s432, 1
      %p436 = scmp.eq.s32.totalorder %s43, 1
      %p437 = scmp.ne.s32.totalorder %s432, %s434
      %p438 = scmp.eq.s32.totalorder %s43, 0
      %p439 = por %p437, %p438
      %p440 = scmp.ne.s32.totalorder %s432, %s434
      %p441 = scmp.eq.s32.totalorder %s48, 1
      %p442 = por %p440, %p441
      %p443 = scmp.ne.s32.totalorder %s434, %s435
      %p444 = scmp.eq.s32.totalorder %s48, 0
      %p445 = por %p443, %p444
      %p446 = scmp.ne.s32.totalorder %s434, %s435
      %p447 = scmp.eq.s32.totalorder %s49, 1
      %p448 = por %p446, %p447
      %p450 = scmp.ne.s32.totalorder %s435, %s449
      %p451 = scmp.eq.s32.totalorder %s49, 0
      %p452 = por %p450, %p451
      %s454 = sadd.s32 %s453, 1
      %p457 = scmp.eq.s32.totalorder %s43, 1
      %p458 = scmp.ne.s32.totalorder %s453, %s455
      %p459 = scmp.eq.s32.totalorder %s43, 0
      %p460 = por %p458, %p459
      %p461 = scmp.ne.s32.totalorder %s453, %s455
      %p462 = scmp.eq.s32.totalorder %s48, 1
      %p463 = por %p461, %p462
      %p464 = scmp.ne.s32.totalorder %s455, %s456
      %p465 = scmp.eq.s32.totalorder %s48, 0
      %p466 = por %p464, %p465
      %p467 = scmp.ne.s32.totalorder %s455, %s456
      %p468 = scmp.eq.s32.totalorder %s49, 1
      %p469 = por %p467, %p468
      %p471 = scmp.ne.s32.totalorder %s456, %s470
      %p472 = scmp.eq.s32.totalorder %s49, 0
      %p473 = por %p471, %p472
      %s475 = sadd.s32 %s474, 1
      %p478 = scmp.eq.s32.totalorder %s43, 1
      %p479 = scmp.ne.s32.totalorder %s474, %s476
      %p480 = scmp.eq.s32.totalorder %s43, 0
      %p481 = por %p479, %p480
      %p482 = scmp.ne.s32.totalorder %s474, %s476
      %p483 = scmp.eq.s32.totalorder %s48, 1
      %p484 = por %p482, %p483
      %p485 = scmp.ne.s32.totalorder %s476, %s477
      %p486 = scmp.eq.s32.totalorder %s48, 0
      %p487 = por %p485, %p486
      %p488 = scmp.ne.s32.totalorder %s476, %s477
      %p489 = scmp.eq.s32.totalorder %s49, 1
      %p490 = por %p488, %p489
      %p492 = scmp.ne.s32.totalorder %s477, %s491
      %p493 = scmp.eq.s32.totalorder %s49, 0
      %p494 = por %p492, %p493
      %s496 = sadd.s32 %s495, 1
      %p499 = scmp.eq.s32.totalorder %s43, 1
      %p500 = scmp.ne.s32.totalorder %s495, %s497
      %p501 = scmp.eq.s32.totalorder %s43, 0
      %p502 = por %p500, %p501
      %p503 = scmp.ne.s32.totalorder %s495, %s497
      %p504 = scmp.eq.s32.totalorder %s48, 1
      %p505 = por %p503, %p504
      %p506 = scmp.ne.s32.totalorder %s497, %s498
      %p507 = scmp.eq.s32.totalorder %s48, 0
      %p508 = por %p506, %p507
      %p509 = scmp.ne.s32.totalorder %s497, %s498
      %p510 = scmp.eq.s32.totalorder %s49, 1
      %p511 = por %p509, %p510
      %p513 = scmp.ne.s32.totalorder %s498, %s512
      %p514 = scmp.eq.s32.totalorder %s49, 0
      %p515 = por %p513, %p514
      %s517 = sadd.s32 %s516, 1
      %p520 = scmp.eq.s32.totalorder %s43, 1
      %p521 = scmp.ne.s32.totalorder %s516, %s518
      %p522 = scmp.eq.s32.totalorder %s43, 0
      %p523 = por %p521, %p522
      %p524 = scmp.ne.s32.totalorder %s516, %s518
      %p525 = scmp.eq.s32.totalorder %s48, 1
      %p526 = por %p524, %p525
      %p527 = scmp.ne.s32.totalorder %s518, %s519
      %p528 = scmp.eq.s32.totalorder %s48, 0
      %p529 = por %p527, %p528
      %p530 = scmp.ne.s32.totalorder %s518, %s519
      %p531 = scmp.eq.s32.totalorder %s49, 1
      %p532 = por %p530, %p531
      %p534 = scmp.ne.s32.totalorder %s519, %s533
      %p535 = scmp.eq.s32.totalorder %s49, 0
      %p536 = por %p534, %p535
      %s538 = sadd.s32 %s537, 1
      %p541 = scmp.eq.s32.totalorder %s43, 1
      %p542 = scmp.ne.s32.totalorder %s537, %s539
      %p543 = scmp.eq.s32.totalorder %s43, 0
      %p544 = por %p542, %p543
      %p545 = scmp.ne.s32.totalorder %s537, %s539
      %p546 = scmp.eq.s32.totalorder %s48, 1
      %p547 = por %p545, %p546
      %p548 = scmp.ne.s32.totalorder %s539, %s540
      %p549 = scmp.eq.s32.totalorder %s48, 0
      %p550 = por %p548, %p549
      %p551 = scmp.ne.s32.totalorder %s539, %s540
      %p552 = scmp.eq.s32.totalorder %s49, 1
      %p553 = por %p551, %p552
      %p555 = scmp.ne.s32.totalorder %s540, %s554
      %p556 = scmp.eq.s32.totalorder %s49, 0
      %p557 = por %p555, %p556
      %s558 = ssub.s32 %s43, %s50
      %p559 = scmp.eq.s32.totalorder %s558, 0
      %s561 = sadd.s32 %s560, 1
      %s562 = scalar_select %p559, %s560, %s561
      %p565 = pneg %p559
      %p566 = scmp.eq.s32.totalorder %s43, 1
      %p567 = por %p565, %p566
      %p568 = scmp.ne.s32.totalorder %s560, %s563
      %p569 = scmp.eq.s32.totalorder %s43, 0
      %p570 = por %p568, %p569
      %p571 = scmp.ne.s32.totalorder %s560, %s563
      %p572 = scmp.eq.s32.totalorder %s48, 1
      %p573 = por %p571, %p572
      %p574 = scmp.ne.s32.totalorder %s563, %s564
      %p575 = scmp.eq.s32.totalorder %s48, 0
      %p576 = por %p574, %p575
      %p577 = scmp.ne.s32.totalorder %s563, %s564
      %p578 = scmp.eq.s32.totalorder %s49, 1
      %p579 = por %p577, %p578
      %p581 = scmp.ne.s32.totalorder %s564, %s580
      %p582 = scmp.eq.s32.totalorder %s49, 0
      %p583 = por %p581, %p582
      %s584 = ssub.s32 %s43, %s50
      %p585 = scmp.eq.s32.totalorder %s584, 0
      %s587 = sadd.s32 %s586, 1
      %s588 = scalar_select %p585, %s586, %s587
      %p591 = pneg %p585
      %p592 = scmp.eq.s32.totalorder %s43, 1
      %p593 = por %p591, %p592
      %p594 = scmp.ne.s32.totalorder %s586, %s589
      %p595 = scmp.eq.s32.totalorder %s43, 0
      %p596 = por %p594, %p595
      %p597 = scmp.ne.s32.totalorder %s586, %s589
      %p598 = scmp.eq.s32.totalorder %s48, 1
      %p599 = por %p597, %p598
      %p600 = scmp.ne.s32.totalorder %s589, %s590
      %p601 = scmp.eq.s32.totalorder %s48, 0
      %p602 = por %p600, %p601
      %p603 = scmp.ne.s32.totalorder %s589, %s590
      %p604 = scmp.eq.s32.totalorder %s49, 1
      %p605 = por %p603, %p604
      %p607 = scmp.ne.s32.totalorder %s590, %s606
      %p608 = scmp.eq.s32.totalorder %s49, 0
      %p609 = por %p607, %p608
      %s610 = ssub.s32 %s43, %s50
      %p611 = scmp.eq.s32.totalorder %s610, 0
      %s613 = sadd.s32 %s612, 1
      %s614 = scalar_select %p611, %s612, %s613
      %p617 = pneg %p611
      %p618 = scmp.eq.s32.totalorder %s43, 1
      %p619 = por %p617, %p618
      %p620 = scmp.ne.s32.totalorder %s612, %s615
      %p621 = scmp.eq.s32.totalorder %s43, 0
      %p622 = por %p620, %p621
      %p623 = scmp.ne.s32.totalorder %s612, %s615
      %p624 = scmp.eq.s32.totalorder %s48, 1
      %p625 = por %p623, %p624
      %p626 = scmp.ne.s32.totalorder %s615, %s616
      %p627 = scmp.eq.s32.totalorder %s48, 0
      %p628 = por %p626, %p627
      %p629 = scmp.ne.s32.totalorder %s615, %s616
      %p630 = scmp.eq.s32.totalorder %s49, 1
      %p631 = por %p629, %p630
      %p633 = scmp.ne.s32.totalorder %s616, %s632
      %p634 = scmp.eq.s32.totalorder %s49, 0
      %p635 = por %p633, %p634
      %s636 = ssub.s32 %s43, %s50
      %p637 = scmp.eq.s32.totalorder %s636, 0
      %s639 = sadd.s32 %s638, 1
      %s640 = scalar_select %p637, %s638, %s639
      %p643 = pneg %p637
      %p644 = scmp.eq.s32.totalorder %s43, 1
      %p645 = por %p643, %p644
      %p646 = scmp.ne.s32.totalorder %s638, %s641
      %p647 = scmp.eq.s32.totalorder %s43, 0
      %p648 = por %p646, %p647
      %p649 = scmp.ne.s32.totalorder %s638, %s641
      %p650 = scmp.eq.s32.totalorder %s48, 1
      %p651 = por %p649, %p650
      %p652 = scmp.ne.s32.totalorder %s641, %s642
      %p653 = scmp.eq.s32.totalorder %s48, 0
      %p654 = por %p652, %p653
      %p655 = scmp.ne.s32.totalorder %s641, %s642
      %p656 = scmp.eq.s32.totalorder %s49, 1
      %p657 = por %p655, %p656
      %p659 = scmp.ne.s32.totalorder %s642, %s658
      %p660 = scmp.eq.s32.totalorder %s49, 0
      %p661 = por %p659, %p660
      %s662 = ssub.s32 %s43, %s50
      %p663 = scmp.eq.s32.totalorder %s662, 0
      %s665 = sadd.s32 %s664, 1
      %s666 = scalar_select %p663, %s664, %s665
      %p669 = pneg %p663
      %p670 = scmp.eq.s32.totalorder %s43, 1
      %p671 = por %p669, %p670
      %p672 = scmp.ne.s32.totalorder %s664, %s667
      %p673 = scmp.eq.s32.totalorder %s43, 0
      %p674 = por %p672, %p673
      %p675 = scmp.ne.s32.totalorder %s664, %s667
      %p676 = scmp.eq.s32.totalorder %s48, 1
      %p677 = por %p675, %p676
      %p678 = scmp.ne.s32.totalorder %s667, %s668
      %p679 = scmp.eq.s32.totalorder %s48, 0
      %p680 = por %p678, %p679
      %p681 = scmp.ne.s32.totalorder %s667, %s668
      %p682 = scmp.eq.s32.totalorder %s49, 1
      %p683 = por %p681, %p682
      %p685 = scmp.ne.s32.totalorder %s668, %s684
      %p686 = scmp.eq.s32.totalorder %s49, 0
      %p687 = por %p685, %p686
      %s688 = ssub.s32 %s43, %s50
      %p689 = scmp.eq.s32.totalorder %s688, 0
      %s691 = sadd.s32 %s690, 1
      %s692 = scalar_select %p689, %s690, %s691
      %p695 = pneg %p689
      %p696 = scmp.eq.s32.totalorder %s43, 1
      %p697 = por %p695, %p696
      %p698 = scmp.ne.s32.totalorder %s690, %s693
      %p699 = scmp.eq.s32.totalorder %s43, 0
      %p700 = por %p698, %p699
      %p701 = scmp.ne.s32.totalorder %s690, %s693
      %p702 = scmp.eq.s32.totalorder %s48, 1
      %p703 = por %p701, %p702
      %p704 = scmp.ne.s32.totalorder %s693, %s694
      %p705 = scmp.eq.s32.totalorder %s48, 0
      %p706 = por %p704, %p705
      %p707 = scmp.ne.s32.totalorder %s693, %s694
      %p708 = scmp.eq.s32.totalorder %s49, 1
      %p709 = por %p707, %p708
      %p711 = scmp.ne.s32.totalorder %s694, %s710
      %p712 = scmp.eq.s32.totalorder %s49, 0
      %p713 = por %p711, %p712
      %p714 = scmp.le.s32.totalorder 1, %s43
      %p715 = scmp.lt.s32.totalorder %s43, 3
      %p716 = pnand %p714, %p715
      %p717 = pneg %p716
      // Predicated region
      $region9: #{tpu_custom_call.1} parent=5 // pred_check
        _
      $region10: #{tpu_custom_call.1} parent=5 // pred_check_branch
        %719 = sbr.rel (%p716) target = $region12
      $region11: #{tpu_custom_call.1} parent=5 // pred_region
        %s720 = ssub.s32 %s43, 1
        // Predicated region
        $region13: #{tpu_custom_call.1} parent=11 // pred_check
          %p721 = pneg %p298
        $region14: #{tpu_custom_call.1} parent=11 // pred_check_branch
          %723 = sbr.rel (%p721) target = $region16
        $region15: #{tpu_custom_call.1} parent=11 // pred_region
          _
        $region16: #{tpu_custom_call.1} parent=11 // pred_fallthru
          _
        // Predicated region
        $region17: #{tpu_custom_call.1} parent=11 // pred_check
          %p724 = pneg %p319
        $region18: #{tpu_custom_call.1} parent=11 // pred_check_branch
          %726 = sbr.rel (%p724) target = $region20
        $region19: #{tpu_custom_call.1} parent=11 // pred_region
          _
        $region20: #{tpu_custom_call.1} parent=11 // pred_fallthru
          _
        // Predicated region
        $region21: #{tpu_custom_call.1} parent=11 // pred_check
          %p727 = pneg %p340
        $region22: #{tpu_custom_call.1} parent=11 // pred_check_branch
          %729 = sbr.rel (%p727) target = $region24
        $region23: #{tpu_custom_call.1} parent=11 // pred_region
          _
        $region24: #{tpu_custom_call.1} parent=11 // pred_fallthru
          _
        // Predicated region
        $region25: #{tpu_custom_call.1} parent=11 // pred_check
          %p730 = pneg %p361
        $region26: #{tpu_custom_call.1} parent=11 // pred_check_branch
          %732 = sbr.rel (%p730) target = $region28
        $region27: #{tpu_custom_call.1} parent=11 // pred_region
          _
        $region28: #{tpu_custom_call.1} parent=11 // pred_fallthru
          _
        // Predicated region
        $region29: #{tpu_custom_call.1} parent=11 // pred_check
          %p733 = pneg %p382
        $region30: #{tpu_custom_call.1} parent=11 // pred_check_branch
          %735 = sbr.rel (%p733) target = $region32
        $region31: #{tpu_custom_call.1} parent=11 // pred_region
          _
        $region32: #{tpu_custom_call.1} parent=11 // pred_fallthru
          _
        // Predicated region
        $region33: #{tpu_custom_call.1} parent=11 // pred_check
          %p736 = pneg %p403
        $region34: #{tpu_custom_call.1} parent=11 // pred_check_branch
          %738 = sbr.rel (%p736) target = $region36
        $region35: #{tpu_custom_call.1} parent=11 // pred_region
          _
        $region36: #{tpu_custom_call.1} parent=11 // pred_fallthru
          _
        // Predicated region
        $region37: #{tpu_custom_call.1} parent=11 // pred_check
          %p739 = pneg %p424
        $region38: #{tpu_custom_call.1} parent=11 // pred_check_branch
          %741 = sbr.rel (%p739) target = $region40
        $region39: #{tpu_custom_call.1} parent=11 // pred_region
          _
        $region40: #{tpu_custom_call.1} parent=11 // pred_fallthru
          _
        // Predicated region
        $region41: #{tpu_custom_call.1} parent=11 // pred_check
          %p742 = pneg %p445
        $region42: #{tpu_custom_call.1} parent=11 // pred_check_branch
          %744 = sbr.rel (%p742) target = $region44
        $region43: #{tpu_custom_call.1} parent=11 // pred_region
          _
        $region44: #{tpu_custom_call.1} parent=11 // pred_fallthru
          _
        // Predicated region
        $region45: #{tpu_custom_call.1} parent=11 // pred_check
          %p745 = pneg %p466
        $region46: #{tpu_custom_call.1} parent=11 // pred_check_branch
          %747 = sbr.rel (%p745) target = $region48
        $region47: #{tpu_custom_call.1} parent=11 // pred_region
          _
        $region48: #{tpu_custom_call.1} parent=11 // pred_fallthru
          _
        // Predicated region
        $region49: #{tpu_custom_call.1} parent=11 // pred_check
          %p748 = pneg %p487
        $region50: #{tpu_custom_call.1} parent=11 // pred_check_branch
          %750 = sbr.rel (%p748) target = $region52
        $region51: #{tpu_custom_call.1} parent=11 // pred_region
          _
        $region52: #{tpu_custom_call.1} parent=11 // pred_fallthru
          _
        // Predicated region
        $region53: #{tpu_custom_call.1} parent=11 // pred_check
          %p751 = pneg %p508
        $region54: #{tpu_custom_call.1} parent=11 // pred_check_branch
          %753 = sbr.rel (%p751) target = $region56
        $region55: #{tpu_custom_call.1} parent=11 // pred_region
          _
        $region56: #{tpu_custom_call.1} parent=11 // pred_fallthru
          _
        // Predicated region
        $region57: #{tpu_custom_call.1} parent=11 // pred_check
          %p754 = pneg %p529
        $region58: #{tpu_custom_call.1} parent=11 // pred_check_branch
          %756 = sbr.rel (%p754) target = $region60
        $region59: #{tpu_custom_call.1} parent=11 // pred_region
          _
        $region60: #{tpu_custom_call.1} parent=11 // pred_fallthru
          _
        // Predicated region
        $region61: #{tpu_custom_call.1} parent=11 // pred_check
          %p757 = pneg %p550
        $region62: #{tpu_custom_call.1} parent=11 // pred_check_branch
          %759 = sbr.rel (%p757) target = $region64
        $region63: #{tpu_custom_call.1} parent=11 // pred_region
          _
        $region64: #{tpu_custom_call.1} parent=11 // pred_fallthru
          _
      $region12: #{tpu_custom_call.1} parent=5 // pred_fallthru
        _
      %p760 = scmp.lt.s32.totalorder %s43, 2
      // Predicated region
      $region65: #{tpu_custom_call.1} parent=5 // pred_check
        %p761 = pneg %p760
      $region66: #{tpu_custom_call.1} parent=5 // pred_check_branch
        %763 = sbr.rel (%p761) target = $region68
      $region67: #{tpu_custom_call.1} parent=5 // pred_region
        // Predicated region
        $region69: #{tpu_custom_call.1} parent=67 // pred_check
          %p764 = pneg %p63
        $region70: #{tpu_custom_call.1} parent=67 // pred_check_branch
          %766 = sbr.rel (%p764) target = $region72
        $region71: #{tpu_custom_call.1} parent=67 // pred_region
          %p767 = scmp.lt.s32.totalorder %s43, 1
          %s768 = scalar_select %p767, %s43, 1
          %s769 = smul.addr %s768, 8
          %s770 = scalar_lea.vmem %s0, %s769
        $region72: #{tpu_custom_call.1} parent=67 // pred_fallthru
          _
        // Predicated region
        $region73: #{tpu_custom_call.1} parent=67 // pred_check
          %p771 = pneg %p89
        $region74: #{tpu_custom_call.1} parent=67 // pred_check_branch
          %773 = sbr.rel (%p771) target = $region76
        $region75: #{tpu_custom_call.1} parent=67 // pred_region
          %p774 = scmp.lt.s32.totalorder %s43, 1
          %s775 = scalar_select %p774, %s43, 1
          %s776 = smul.addr %s775, 8
          %s777 = scalar_lea.vmem %s1, %s776
        $region76: #{tpu_custom_call.1} parent=67 // pred_fallthru
          _
        // Predicated region
        $region77: #{tpu_custom_call.1} parent=67 // pred_check
          %p778 = pneg %p115
        $region78: #{tpu_custom_call.1} parent=67 // pred_check_branch
          %780 = sbr.rel (%p778) target = $region80
        $region79: #{tpu_custom_call.1} parent=67 // pred_region
          %p781 = scmp.lt.s32.totalorder %s43, 1
          %s782 = scalar_select %p781, %s43, 1
          %s783 = smul.addr %s782, 4
          %s784 = smul.addr %s783, 8
          %s785 = scalar_lea.vmem %s2, %s784
        $region80: #{tpu_custom_call.1} parent=67 // pred_fallthru
          _
        // Predicated region
        $region81: #{tpu_custom_call.1} parent=67 // pred_check
          %p786 = pneg %p141
        $region82: #{tpu_custom_call.1} parent=67 // pred_check_branch
          %788 = sbr.rel (%p786) target = $region84
        $region83: #{tpu_custom_call.1} parent=67 // pred_region
          %p789 = scmp.lt.s32.totalorder %s43, 1
          %s790 = scalar_select %p789, %s43, 1
          %s791 = smul.addr %s790, 8
          %s792 = scalar_lea.vmem %s3, %s791
        $region84: #{tpu_custom_call.1} parent=67 // pred_fallthru
          _
        // Predicated region
        $region85: #{tpu_custom_call.1} parent=67 // pred_check
          %p793 = pneg %p167
        $region86: #{tpu_custom_call.1} parent=67 // pred_check_branch
          %795 = sbr.rel (%p793) target = $region88
        $region87: #{tpu_custom_call.1} parent=67 // pred_region
          %p796 = scmp.lt.s32.totalorder %s43, 1
          %s797 = scalar_select %p796, %s43, 1
          %s798 = smul.addr %s797, 8
          %s799 = scalar_lea.vmem %s4, %s798
        $region88: #{tpu_custom_call.1} parent=67 // pred_fallthru
          _
        // Predicated region
        $region89: #{tpu_custom_call.1} parent=67 // pred_check
          %p800 = pneg %p193
        $region90: #{tpu_custom_call.1} parent=67 // pred_check_branch
          %802 = sbr.rel (%p800) target = $region92
        $region91: #{tpu_custom_call.1} parent=67 // pred_region
          %p803 = scmp.lt.s32.totalorder %s43, 1
          %s804 = scalar_select %p803, %s43, 1
          %s805 = smul.addr %s804, 4
          %s806 = smul.addr %s805, 8
          %s807 = scalar_lea.vmem %s5, %s806
        $region92: #{tpu_custom_call.1} parent=67 // pred_fallthru
          _
        // Predicated region
        $region93: #{tpu_custom_call.1} parent=67 // pred_check
          %p808 = pneg %p219
        $region94: #{tpu_custom_call.1} parent=67 // pred_check_branch
          %810 = sbr.rel (%p808) target = $region96
        $region95: #{tpu_custom_call.1} parent=67 // pred_region
          %p811 = scmp.lt.s32.totalorder %s43, 1
          %s812 = scalar_select %p811, %s43, 1
          %s813 = smul.addr %s812, 4
          %s814 = smul.addr %s813, 8
          %s815 = scalar_lea.vmem %s6, %s814
        $region96: #{tpu_custom_call.1} parent=67 // pred_fallthru
          _
        // Predicated region
        $region97: #{tpu_custom_call.1} parent=67 // pred_check
          %p816 = pneg %p245
        $region98: #{tpu_custom_call.1} parent=67 // pred_check_branch
          %818 = sbr.rel (%p816) target = $region100
        $region99: #{tpu_custom_call.1} parent=67 // pred_region
          %p819 = scmp.lt.s32.totalorder %s43, 1
          %s820 = scalar_select %p819, %s43, 1
          %s821 = smul.addr %s820, 4
          %s822 = smul.addr %s821, 8
          %s823 = scalar_lea.vmem %s7, %s822
        $region100: #{tpu_custom_call.1} parent=67 // pred_fallthru
          _
        // Predicated region
        $region101: #{tpu_custom_call.1} parent=67 // pred_check
          %p824 = pneg %p271
        $region102: #{tpu_custom_call.1} parent=67 // pred_check_branch
          %826 = sbr.rel (%p824) target = $region104
        $region103: #{tpu_custom_call.1} parent=67 // pred_region
          %p827 = scmp.lt.s32.totalorder %s43, 1
          %s828 = scalar_select %p827, %s43, 1
          %s829 = smul.addr %s828, 4
          %s830 = smul.addr %s829, 8
          %s831 = scalar_lea.vmem %s8, %s830
        $region104: #{tpu_custom_call.1} parent=67 // pred_fallthru
          _
      $region68: #{tpu_custom_call.1} parent=5 // pred_fallthru
        _
      %p832 = scmp.le.s32.totalorder 1, %s43
      %p833 = scmp.lt.s32.totalorder %s43, 3
      %p834 = pnand %p832, %p833
      %p835 = pneg %p834
      // Predicated region
      $region105: #{tpu_custom_call.1} parent=5 // pred_check
        _
      $region106: #{tpu_custom_call.1} parent=5 // pred_check_branch
        %837 = sbr.rel (%p834) target = $region108
      $region107: #{tpu_custom_call.1} parent=5 // pred_region
        %s838 = ssub.s32 %s43, 1
        %p839 = scmp.lt.s32.totalorder %s48, 1
        %s840 = scalar_select %p839, %s48, 1
        %s841 = smul.addr %s840, 8
        %s842 = scalar_lea.vmem %s0, %s841
        %p843 = pneg %p69
        %p844 = pneg %p66
        %p845 = scmp.lt.s32.totalorder %s48, 1
        %s846 = scalar_select %p845, %s48, 1
        %s847 = smul.addr %s846, 8
        %s848 = scalar_lea.vmem %s1, %s847
        %p849 = pneg %p95
        %p850 = pneg %p92
        %p851 = scmp.lt.s32.totalorder %s48, 1
        %s852 = scalar_select %p851, %s48, 1
        %s853 = smul.addr %s852, 4
        %s854 = smul.addr %s853, 8
        %s855 = scalar_lea.vmem %s2, %s854
        %p856 = pneg %p121
        %p857 = pneg %p118
        %p858 = scmp.lt.s32.totalorder %s48, 1
        %s859 = scalar_select %p858, %s48, 1
        %s860 = smul.addr %s859, 8
        %s861 = scalar_lea.vmem %s3, %s860
        %p862 = pneg %p147
        %p863 = pneg %p144
        %p864 = scmp.lt.s32.totalorder %s48, 1
        %s865 = scalar_select %p864, %s48, 1
        %s866 = smul.addr %s865, 8
        %s867 = scalar_lea.vmem %s4, %s866
        %p868 = pneg %p173
        %p869 = pneg %p170
        %p870 = scmp.lt.s32.totalorder %s48, 1
        %s871 = scalar_select %p870, %s48, 1
        %s872 = smul.addr %s871, 4
        %s873 = smul.addr %s872, 8
        %s874 = scalar_lea.vmem %s5, %s873
        %p875 = pneg %p199
        %p876 = pneg %p196
        %p877 = scmp.lt.s32.totalorder %s48, 1
        %s878 = scalar_select %p877, %s48, 1
        %s879 = smul.addr %s878, 4
        %s880 = smul.addr %s879, 8
        %s881 = scalar_lea.vmem %s6, %s880
        %p882 = pneg %p225
        %p883 = pneg %p222
        %p884 = scmp.lt.s32.totalorder %s48, 1
        %s885 = scalar_select %p884, %s48, 1
        %s886 = smul.addr %s885, 4
        %s887 = smul.addr %s886, 8
        %s888 = scalar_lea.vmem %s7, %s887
        %p889 = pneg %p251
        %p890 = pneg %p248
        %p891 = scmp.lt.s32.totalorder %s48, 1
        %s892 = scalar_select %p891, %s48, 1
        %s893 = smul.addr %s892, 4
        %s894 = smul.addr %s893, 8
        %s895 = scalar_lea.vmem %s8, %s894
        %p896 = pneg %p277
        %p897 = pneg %p274
        %p898 = pneg %p298
        %p899 = pneg %p295
        %p900 = pneg %p319
        %p901 = pneg %p316
        %p902 = pneg %p340
        %p903 = pneg %p337
        %p904 = pneg %p361
        %p905 = pneg %p358
        %p906 = pneg %p382
        %p907 = pneg %p379
        %p908 = pneg %p403
        %p909 = pneg %p400
        %p910 = pneg %p424
        %p911 = pneg %p421
        %p912 = pneg %p445
        %p913 = pneg %p442
        %p914 = pneg %p466
        %p915 = pneg %p463
        %p916 = pneg %p487
        %p917 = pneg %p484
        %p918 = pneg %p508
        %p919 = pneg %p505
        %p920 = pneg %p529
        %p921 = pneg %p526
        %p922 = pneg %p550
        %p923 = pneg %p547
        %p924 = pneg %p576
        %p925 = pneg %p573
        %s926 = sand.u32 %s563, 1
        %s927 = scalar_lea.sflag [#allocation3], %s926
        %s928 = sand.u32 %s563, 1
        %s929 = smul.addr %s928, 8
        %s930 = scalar_lea.vmem [#allocation2], %s929
        %p931 = pneg %p602
        %p932 = pneg %p599
        %s933 = sand.u32 %s48, 1
        %s934 = scalar_lea.sflag [#allocation5], %s933
        %s935 = sand.u32 %s589, 1
        %s936 = smul.addr %s935, 8
        %s937 = scalar_lea.vmem [#allocation4], %s936
        %p938 = pneg %p628
        %p939 = pneg %p625
        %s940 = sand.u32 %s48, 1
        %s941 = scalar_lea.sflag [#allocation5], %s940
        %s942 = sand.u32 %s615, 1
        %s943 = smul.addr %s942, 32
        %s944 = scalar_lea.vmem [#allocation6], %s943
        %p945 = pneg %p654
        %p946 = pneg %p651
        %s947 = sand.u32 %s641, 1
        %s948 = scalar_lea.sflag [#allocation8], %s947
        %s949 = sand.u32 %s641, 1
        %s950 = smul.addr %s949, 8
        %s951 = scalar_lea.vmem [#allocation7], %s950
        %p952 = pneg %p680
        %p953 = pneg %p677
        %p954 = scmp.lt.s32.totalorder %s48, 1
        %s955 = scalar_select %p954, %s48, 1
        %s956 = smul.addr %s955, 8
        %s957 = scalar_lea.vmem %s26, %s956
        %p958 = pneg %p706
        %p959 = pneg %p703
        %p960 = scmp.lt.s32.totalorder %s48, 1
        %s961 = scalar_select %p960, %s48, 1
        %s962 = smul.addr %s961, 4
        %s963 = smul.addr %s962, 8
        %s964 = scalar_lea.vmem %s27, %s963
        %p965 = scmp.lt.s32.totalorder %s48, 1
        %s966 = scalar_select %p965, %s48, 1
        %s967 = smul.addr %s966, 8
        %s968 = scalar_lea.vmem %s0, %s967
        %p969 = scmp.lt.s32.totalorder %s48, 1
        %s970 = scalar_select %p969, %s48, 1
        %s971 = smul.addr %s970, 8
        %s972 = scalar_lea.vmem %s1, %s971
        %p973 = scmp.lt.s32.totalorder %s48, 1
        %s974 = scalar_select %p973, %s48, 1
        %s975 = smul.addr %s974, 4
        %s976 = smul.addr %s975, 8
        %s977 = scalar_lea.vmem %s2, %s976
        %p978 = scmp.lt.s32.totalorder %s48, 1
        %s979 = scalar_select %p978, %s48, 1
        %s980 = smul.addr %s979, 8
        %s981 = scalar_lea.vmem %s3, %s980
        %p982 = scmp.lt.s32.totalorder %s48, 1
        %s983 = scalar_select %p982, %s48, 1
        %s984 = smul.addr %s983, 8
        %s985 = scalar_lea.vmem %s4, %s984
        %p986 = scmp.lt.s32.totalorder %s48, 1
        %s987 = scalar_select %p986, %s48, 1
        %s988 = smul.addr %s987, 4
        %s989 = smul.addr %s988, 8
        %s990 = scalar_lea.vmem %s5, %s989
        %p991 = scmp.lt.s32.totalorder %s48, 1
        %s992 = scalar_select %p991, %s48, 1
        %s993 = smul.addr %s992, 4
        %s994 = smul.addr %s993, 8
        %s995 = scalar_lea.vmem %s6, %s994
        %p996 = scmp.lt.s32.totalorder %s48, 1
        %s997 = scalar_select %p996, %s48, 1
        %s998 = smul.addr %s997, 4
        %s999 = smul.addr %s998, 8
        %s1000 = scalar_lea.vmem %s7, %s999
        %p1001 = scmp.lt.s32.totalorder %s48, 1
        %s1002 = scalar_select %p1001, %s48, 1
        %s1003 = smul.addr %s1002, 4
        %s1004 = smul.addr %s1003, 8
        %s1005 = scalar_lea.vmem %s8, %s1004
        %p1006 = scmp.lt.s32.totalorder %s48, 1
        %s1007 = scalar_select %p1006, %s48, 1
        %s1008 = smul.addr %s1007, 8
        %s1009 = scalar_lea.vmem %s26, %s1008
        %p1010 = scmp.lt.s32.totalorder %s48, 1
        %s1011 = scalar_select %p1010, %s48, 1
        %s1012 = smul.addr %s1011, 4
        %s1013 = smul.addr %s1012, 8
        %s1014 = scalar_lea.vmem %s27, %s1013
        %v1015 = vld [vmem:[%s968] sm:$0xff]
        %v1016 = vld [vmem:[%s972] sm:$0xff]
        %v1017 = vld [vmem:[%s977] sm:$0xff]
        %v1018 = vld [vmem:[%s977 + $0x8] sm:$0xff]
        %v1019 = vld [vmem:[%s977 + $0x10] sm:$0xff]
        %v1020 = vld [vmem:[%s977 + $0x18] sm:$0xff]
        %v1021 = vld [vmem:[%s981] sm:$0xff]
        %v1022 = vld [vmem:[%s985] sm:$0xff]
        %v1023 = vld [vmem:[%s990] sm:$0xff]
        %v1024 = vld [vmem:[%s990 + $0x8] sm:$0xff]
        %v1025 = vld [vmem:[%s990 + $0x10] sm:$0xff]
        %v1026 = vld [vmem:[%s990 + $0x18] sm:$0xff]
        %v1027 = vld [vmem:[%s995] sm:$0xff]
        %v1028 = vld [vmem:[%s995 + $0x8] sm:$0xff]
        %v1029 = vld [vmem:[%s995 + $0x10] sm:$0xff]
        %v1030 = vld [vmem:[%s995 + $0x18] sm:$0xff]
        %v1031 = vld [vmem:[%s1000] sm:$0xff]
        %v1032 = vld [vmem:[%s1000 + $0x8] sm:$0xff]
        %v1033 = vld [vmem:[%s1000 + $0x10] sm:$0xff]
        %v1034 = vld [vmem:[%s1000 + $0x18] sm:$0xff]
        %v1035 = vld [vmem:[%s1005] sm:$0xff]
        %v1036 = vld [vmem:[%s1005 + $0x8] sm:$0xff]
        %v1037 = vld [vmem:[%s1005 + $0x10] sm:$0xff]
        %v1038 = vld [vmem:[%s1005 + $0x18] sm:$0xff]
        %v1039 = vld [vmem:[%s12] sm:$0xff]
        %v1040 = vld [vmem:[%s12 + $0x8] sm:$0xff]
        %v1041 = vld [vmem:[%s12 + $0x10] sm:$0xff]
        %v1042 = vld [vmem:[%s12 + $0x18] sm:$0xff]
        %v1043 = vld [vmem:[%s13] sm:$0x1]
        %v1045 = vlaneseq
        %v1046 = vshrl.u32 %v1045, 7
        %v1047 = vsub.s32 0, %v1046
        %v1048 = vrot.slane %v1043, %v1047
        %vm1050 = vcmask 261120
        %v1052 = vsel %vm1050, %v1015, 0
        %1054 = vmatprep.subr.mxu0 0.0
        %1055 = vmatpush1.msra.mxu0 0.0
        %1056 = vmatprep.subr.mxu0 0.0
        %1057 = vmatpush1.msra.mxu0 0.0
        %1058 = vmatprep.subr.mxu0 0.0
        %1059 = vmatpush1.msra.mxu0 0.0
        %1060 = vmatprep.subr.mxu0 0.0
        %1061 = vmatpush1.msra.mxu0 0.0
        %1062 = vmatprep.subr.mxu0 0.0
        %1063 = vmatpush1.msra.mxu0 0.0
        %1064 = vmatprep.subr.mxu0 0.0
        %1065 = vmatpush1.msra.mxu0 0.0
        %1066 = vmatprep.subr.mxu0 0.0
        %1067 = vmatpush1.msra.mxu0 0.0
        %1068 = vmatprep.subr.mxu0 0.0
        %1069 = vmatpush1.msra.mxu0 0.0
        %1070 = vmatprep.subr.mxu0 0.0
        %1071 = vmatpush1.msra.mxu0 0.0
        %1072 = vmatprep.subr.mxu0 0.0
        %1073 = vmatpush1.msra.mxu0 0.0
        %1074 = vmatprep.subr.mxu0 0.0
        %1075 = vmatpush1.msra.mxu0 0.0
        %1076 = vmatprep.subr.mxu0 0.0
        %1077 = vmatpush1.msra.mxu0 0.0
        %1078 = vmatprep.subr.mxu0 0.0
        %1079 = vmatpush1.msra.mxu0 %v1042
        %1080 = vmatprep.subr.mxu0 0.0
        %1081 = vmatpush1.msra.mxu0 %v1041
        %1082 = vmatprep.subr.mxu0 0.0
        %1083 = vmatpush1.msra.mxu0 %v1040
        %1084 = vmatprep.subr.mxu0 0.0
        %1085 = vmatpush1.msra.mxu0 %v1039
        %1086 = vmatprep.subr.mxu0 0.0
        %1087 = vmatpush2.msra.mxu0 0.0
        %1088 = vmatprep.subr.mxu0 0.0
        %1089 = vmatpush2.msra.mxu0 0.0
        %1090 = vmatprep.subr.mxu0 0.0
        %1091 = vmatpush2.msra.mxu0 0.0
        %1092 = vmatprep.subr.mxu0 0.0
        %1093 = vmatpush2.msra.mxu0 0.0
        %1094 = vmatprep.subr.mxu0 0.0
        %1095 = vmatpush2.msra.mxu0 0.0
        %1096 = vmatprep.subr.mxu0 0.0
        %1097 = vmatpush2.msra.mxu0 0.0
        %1098 = vmatprep.subr.mxu0 0.0
        %1099 = vmatpush2.msra.mxu0 0.0
        %1100 = vmatprep.subr.mxu0 0.0
        %1101 = vmatpush2.msra.mxu0 0.0
        %1102 = vmatprep.subr.mxu0 0.0
        %1103 = vmatpush2.msra.mxu0 0.0
        %1104 = vmatprep.subr.mxu0 0.0
        %1105 = vmatpush2.msra.mxu0 0.0
        %1106 = vmatprep.subr.mxu0 0.0
        %1107 = vmatpush2.msra.mxu0 0.0
        %1108 = vmatprep.subr.mxu0 0.0
        %1109 = vmatpush2.msra.mxu0 0.0
        %1110 = vmatprep.subr.mxu0 0.0
        %1111 = vmatpush2.msra.mxu0 0.0
        %1112 = vmatprep.subr.mxu0 0.0
        %1113 = vmatpush2.msra.mxu0 0.0
        %1114 = vmatprep.subr.mxu0 0.0
        %1115 = vmatpush2.msra.mxu0 0.0
        %1116 = vmatprep.subr.mxu0 0.0
        %1117 = vmatpush2.msra.mxu0 0.0
        %1118 = vmatprep.mubr.f32.mxu0 0.0
        %1119 = vmatmul.mubr.f32.gmra.mxu0 %v1052
        %v1120 = vpop.f32.mrf.mxu0
        %v1121 = vadd.f32 %v1048, %v1120
        %v1122 = vpop.f32.mrf.mxu0
        %1123 = vdwg.mxu0
        %v1124 = vxor.u32 %v1121, 2147483648
        %v1125 = vmul.f32 %v1124, 1.442695
        %v1126 = vpow.pop %v1125
        %v1127 = vadd.f32 %v1126, 1.0
        %v1128 = vrcp.pop %v1127
        %v1129 = vmul.f32 1.0, %v1128
        %v1130 = vmul.f32 %v1121, %v1129
        %v1131 = vld [vmem:[%s14] sm:$0xff]
        %v1132 = vld [vmem:[%s14 + $0x8] sm:$0xff]
        %v1133 = vld [vmem:[%s14 + $0x10] sm:$0xff]
        %v1134 = vld [vmem:[%s14 + $0x18] sm:$0xff]
        %v1135 = vld [vmem:[%s14 + $0x20] sm:$0xff]
        %v1136 = vld [vmem:[%s14 + $0x28] sm:$0xff]
        %v1137 = vld [vmem:[%s14 + $0x30] sm:$0xff]
        %v1138 = vld [vmem:[%s14 + $0x38] sm:$0xff]
        %v1139 = vld [vmem:[%s14 + $0x40] sm:$0xff]
        %v1140 = vld [vmem:[%s14 + $0x48] sm:$0xff]
        %v1141 = vld [vmem:[%s14 + $0x50] sm:$0xff]
        %v1142 = vld [vmem:[%s14 + $0x58] sm:$0xff]
        %v1143 = vld [vmem:[%s14 + $0x60] sm:$0xff]
        %v1144 = vld [vmem:[%s14 + $0x68] sm:$0xff]
        %v1145 = vld [vmem:[%s14 + $0x70] sm:$0xff]
        %v1146 = vld [vmem:[%s14 + $0x78] sm:$0xff]
        %v1147 = vld [vmem:[%s15] sm:$0x1]
        %v1149 = vlaneseq
        %v1150 = vshrl.u32 %v1149, 7
        %v1151 = vsub.s32 0, %v1150
        %v1152 = vrot.slane %v1147, %v1151
        %1154 = vmatprep.subr.mxu0 0.0
        %1155 = vmatpush1.msra.mxu0 %v1146
        %1156 = vmatprep.subr.mxu0 0.0
        %1157 = vmatpush1.msra.mxu0 %v1145
        %1158 = vmatprep.subr.mxu0 0.0
        %1159 = vmatpush1.msra.mxu0 %v1144
        %1160 = vmatprep.subr.mxu0 0.0
        %1161 = vmatpush1.msra.mxu0 %v1143
        %1162 = vmatprep.subr.mxu0 0.0
        %1163 = vmatpush1.msra.mxu0 %v1142
        %1164 = vmatprep.subr.mxu0 0.0
        %1165 = vmatpush1.msra.mxu0 %v1141
        %1166 = vmatprep.subr.mxu0 0.0
        %1167 = vmatpush1.msra.mxu0 %v1140
        %1168 = vmatprep.subr.mxu0 0.0
        %1169 = vmatpush1.msra.mxu0 %v1139
        %1170 = vmatprep.subr.mxu0 0.0
        %1171 = vmatpush1.msra.mxu0 %v1138
        %1172 = vmatprep.subr.mxu0 0.0
        %1173 = vmatpush1.msra.mxu0 %v1137
        %1174 = vmatprep.subr.mxu0 0.0
        %1175 = vmatpush1.msra.mxu0 %v1136
        %1176 = vmatprep.subr.mxu0 0.0
        %1177 = vmatpush1.msra.mxu0 %v1135
        %1178 = vmatprep.subr.mxu0 0.0
        %1179 = vmatpush1.msra.mxu0 %v1134
        %1180 = vmatprep.subr.mxu0 0.0
        %1181 = vmatpush1.msra.mxu0 %v1133
        %1182 = vmatprep.subr.mxu0 0.0
        %1183 = vmatpush1.msra.mxu0 %v1132
        %1184 = vmatprep.subr.mxu0 0.0
        %1185 = vmatpush1.msra.mxu0 %v1131
        %1186 = vmatprep.subr.mxu0 0.0
        %1187 = vmatpush2.msra.mxu0 0.0
        %1188 = vmatprep.subr.mxu0 0.0
        %1189 = vmatpush2.msra.mxu0 0.0
        %1190 = vmatprep.subr.mxu0 0.0
        %1191 = vmatpush2.msra.mxu0 0.0
        %1192 = vmatprep.subr.mxu0 0.0
        %1193 = vmatpush2.msra.mxu0 0.0
        %1194 = vmatprep.subr.mxu0 0.0
        %1195 = vmatpush2.msra.mxu0 0.0
        %1196 = vmatprep.subr.mxu0 0.0
        %1197 = vmatpush2.msra.mxu0 0.0
        %1198 = vmatprep.subr.mxu0 0.0
        %1199 = vmatpush2.msra.mxu0 0.0
        %1200 = vmatprep.subr.mxu0 0.0
        %1201 = vmatpush2.msra.mxu0 0.0
        %1202 = vmatprep.subr.mxu0 0.0
        %1203 = vmatpush2.msra.mxu0 0.0
        %1204 = vmatprep.subr.mxu0 0.0
        %1205 = vmatpush2.msra.mxu0 0.0
        %1206 = vmatprep.subr.mxu0 0.0
        %1207 = vmatpush2.msra.mxu0 0.0
        %1208 = vmatprep.subr.mxu0 0.0
        %1209 = vmatpush2.msra.mxu0 0.0
        %1210 = vmatprep.subr.mxu0 0.0
        %1211 = vmatpush2.msra.mxu0 0.0
        %1212 = vmatprep.subr.mxu0 0.0
        %1213 = vmatpush2.msra.mxu0 0.0
        %1214 = vmatprep.subr.mxu0 0.0
        %1215 = vmatpush2.msra.mxu0 0.0
        %1216 = vmatprep.subr.mxu0 0.0
        %1217 = vmatpush2.msra.mxu0 0.0
        %1218 = vmatprep.mubr.f32.mxu0 0.0
        %1219 = vmatmul.mubr.f32.gmra.mxu0 %v1130
        %v1220 = vpop.f32.mrf.mxu0
        %v1221 = vadd.f32 %v1152, %v1220
        %v1222 = vpop.f32.mrf.mxu0
        %1223 = vdwg.mxu0
        %1225 = vrot.lane.b32.xlu0 %v1221, 32
        %v1226 = vpop.permute.xlu0 %1225
        %v1228 = vadd.f32 %v1022, %v1226
        %vm1229 = vcmask 7168
        %1230 = vst.msk [vmem:[%s1009] sm:$0xff] %vm1229, %v1228
        %1231 = vset.pattern.permute.xlu0 96
        %1232 = vperm.xlu0 %1231, %v1221
        %v1233 = vpop.permute.xlu0 %1232
        %v1235 = vmul.f32 %v1233, %v1221
        %1237 = vrot.lane.b32.xlu0 %v1235, 96
        %v1238 = vpop.permute.xlu0 %1237
        %v1240 = vadd.f32 %v1016, %v1238
        %1241 = vst.msk [vmem:[%s937] sm:$0xff] %vm1050, %v1240
        %v1242 = vld [vmem:[%s9] sm:$0x1]
        %v1243 = vlaneseq
        %v1244 = vshrl.u32 %v1243, 7
        %v1245 = vsub.s32 0, %v1244
        %v1246 = vrot.slane %v1242, %v1245
        %1247 = vset.pattern.permute.xlu0 0
        %1248 = vperm.xlu0 %1247, %v1035
        %v1249 = vpop.permute.xlu0 %1248
        %1250 = vset.pattern.permute.xlu0 0
        %1251 = vperm.xlu0 %1250, %v1036
        %v1252 = vpop.permute.xlu0 %1251
        %1253 = vset.pattern.permute.xlu0 0
        %1254 = vperm.xlu0 %1253, %v1037
        %v1255 = vpop.permute.xlu0 %1254
        %1256 = vset.pattern.permute.xlu0 0
        %1257 = vperm.xlu0 %1256, %v1038
        %v1258 = vpop.permute.xlu0 %1257
        %vm1259 = vcmp.eq.s32.totalorder %v1246, %v1249
        %vm1260 = vcmp.eq.s32.totalorder %v1246, %v1252
        %vm1261 = vcmp.eq.s32.totalorder %v1246, %v1255
        %vm1262 = vcmp.eq.s32.totalorder %v1246, %v1258
        %v1263 = vsel %vm1259, 1, 0
        %v1264 = vsel %vm1260, 1, 0
        %v1265 = vsel %vm1261, 1, 0
        %v1266 = vsel %vm1262, 1, 0
        %v1267 = vcvt.s32.f32 %v1263
        %v1268 = vcvt.s32.f32 %v1264
        %v1269 = vcvt.s32.f32 %v1265
        %v1270 = vcvt.s32.f32 %v1266
        %1272 = vrot.lane.b32.xlu0 %v1240, 32
        %v1273 = vpop.permute.xlu0 %1272
        %v1275 = vsel %vm1050, %v1221, %v1273
        %vm1276 = vcmask 64512
        %v1278 = vsel %vm1276, %v1267, 0
        %v1281 = vsel %vm1276, %v1268, 0
        %v1284 = vsel %vm1276, %v1269, 0
        %v1287 = vsel %vm1276, %v1270, 0
        %1289 = vmatprep.subr.mxu0 0.0
        %1290 = vmatpush1.msra.mxu0 0.0
        %1291 = vmatprep.subr.mxu0 0.0
        %1292 = vmatpush1.msra.mxu0 0.0
        %1293 = vmatprep.subr.mxu0 0.0
        %1294 = vmatpush1.msra.mxu0 0.0
        %1295 = vmatprep.subr.mxu0 0.0
        %1296 = vmatpush1.msra.mxu0 0.0
        %1297 = vmatprep.subr.mxu0 0.0
        %1298 = vmatpush1.msra.mxu0 0.0
        %1299 = vmatprep.subr.mxu0 0.0
        %1300 = vmatpush1.msra.mxu0 0.0
        %1301 = vmatprep.subr.mxu0 0.0
        %1302 = vmatpush1.msra.mxu0 0.0
        %1303 = vmatprep.subr.mxu0 0.0
        %1304 = vmatpush1.msra.mxu0 0.0
        %1305 = vmatprep.subr.mxu0 0.0
        %1306 = vmatpush1.msra.mxu0 0.0
        %1307 = vmatprep.subr.mxu0 0.0
        %1308 = vmatpush1.msra.mxu0 0.0
        %1309 = vmatprep.subr.mxu0 0.0
        %1310 = vmatpush1.msra.mxu0 0.0
        %1311 = vmatprep.subr.mxu0 0.0
        %1312 = vmatpush1.msra.mxu0 0.0
        %1313 = vmatprep.subr.mxu0 0.0
        %1314 = vmatpush1.msra.mxu0 0.0
        %1315 = vmatprep.subr.mxu0 0.0
        %1316 = vmatpush1.msra.mxu0 0.0
        %1317 = vmatprep.subr.mxu0 0.0
        %1318 = vmatpush1.msra.mxu0 0.0
        %1319 = vmatprep.subr.mxu0 0.0
        %1320 = vmatpush1.msra.mxu0 %v1275
        %1321 = vmatprep.subr.mxu0 0.0
        %1322 = vmatpush2.msra.mxu0 0.0
        %1323 = vmatprep.subr.mxu0 0.0
        %1324 = vmatpush2.msra.mxu0 0.0
        %1325 = vmatprep.subr.mxu0 0.0
        %1326 = vmatpush2.msra.mxu0 0.0
        %1327 = vmatprep.subr.mxu0 0.0
        %1328 = vmatpush2.msra.mxu0 0.0
        %1329 = vmatprep.subr.mxu0 0.0
        %1330 = vmatpush2.msra.mxu0 0.0
        %1331 = vmatprep.subr.mxu0 0.0
        %1332 = vmatpush2.msra.mxu0 0.0
        %1333 = vmatprep.subr.mxu0 0.0
        %1334 = vmatpush2.msra.mxu0 0.0
        %1335 = vmatprep.subr.mxu0 0.0
        %1336 = vmatpush2.msra.mxu0 0.0
        %1337 = vmatprep.subr.mxu0 0.0
        %1338 = vmatpush2.msra.mxu0 0.0
        %1339 = vmatprep.subr.mxu0 0.0
        %1340 = vmatpush2.msra.mxu0 0.0
        %1341 = vmatprep.subr.mxu0 0.0
        %1342 = vmatpush2.msra.mxu0 0.0
        %1343 = vmatprep.subr.mxu0 0.0
        %1344 = vmatpush2.msra.mxu0 0.0
        %1345 = vmatprep.subr.mxu0 0.0
        %1346 = vmatpush2.msra.mxu0 0.0
        %1347 = vmatprep.subr.mxu0 0.0
        %1348 = vmatpush2.msra.mxu0 0.0
        %1349 = vmatprep.subr.mxu0 0.0
        %1350 = vmatpush2.msra.mxu0 0.0
        %1351 = vmatprep.subr.mxu0 0.0
        %1352 = vmatpush2.msra.mxu0 0.0
        %1353 = vmatprep.mubr.f32.mxu0 0.0
        %1354 = vmatmul.mubr.f32.gmra.mxu0 %v1278
        %v1355 = vpop.f32.mrf.mxu0
        %v1356 = vadd.f32 0.0, %v1355
        %v1357 = vpop.f32.mrf.mxu0
        %1358 = vmatprep.mubr.f32.mxu0 0.0
        %1359 = vmatmul.mubr.f32.gmra.mxu0 %v1281
        %v1360 = vpop.f32.mrf.mxu0
        %v1361 = vadd.f32 0.0, %v1360
        %v1362 = vpop.f32.mrf.mxu0
        %1363 = vmatprep.mubr.f32.mxu0 0.0
        %1364 = vmatmul.mubr.f32.gmra.mxu0 %v1284
        %v1365 = vpop.f32.mrf.mxu0
        %v1366 = vadd.f32 0.0, %v1365
        %v1367 = vpop.f32.mrf.mxu0
        %1368 = vmatprep.mubr.f32.mxu0 0.0
        %1369 = vmatmul.mubr.f32.gmra.mxu0 %v1287
        %v1370 = vpop.f32.mrf.mxu0
        %v1371 = vadd.f32 0.0, %v1370
        %v1372 = vpop.f32.mrf.mxu0
        %1373 = vdwg.mxu0
        %v1374 = vld [vmem:[%s10] sm:$0xff]
        %v1375 = vld [vmem:[%s10 + $0x8] sm:$0xff]
        %v1376 = vld [vmem:[%s10 + $0x10] sm:$0xff]
        %v1377 = vld [vmem:[%s10 + $0x18] sm:$0xff]
        %v1379 = vsel %vm1276, %v1374, 0
        %v1382 = vsel %vm1276, %v1375, 0
        %v1385 = vsel %vm1276, %v1376, 0
        %v1388 = vsel %vm1276, %v1377, 0
        %1390 = vmatprep.subr.mxu0 0.0
        %1391 = vmatpush1.msra.mxu0 0.0
        %1392 = vmatprep.subr.mxu0 0.0
        %1393 = vmatpush1.msra.mxu0 0.0
        %1394 = vmatprep.subr.mxu0 0.0
        %1395 = vmatpush1.msra.mxu0 0.0
        %1396 = vmatprep.subr.mxu0 0.0
        %1397 = vmatpush1.msra.mxu0 0.0
        %1398 = vmatprep.subr.mxu0 0.0
        %1399 = vmatpush1.msra.mxu0 0.0
        %1400 = vmatprep.subr.mxu0 0.0
        %1401 = vmatpush1.msra.mxu0 0.0
        %1402 = vmatprep.subr.mxu0 0.0
        %1403 = vmatpush1.msra.mxu0 0.0
        %1404 = vmatprep.subr.mxu0 0.0
        %1405 = vmatpush1.msra.mxu0 0.0
        %1406 = vmatprep.subr.mxu0 0.0
        %1407 = vmatpush1.msra.mxu0 0.0
        %1408 = vmatprep.subr.mxu0 0.0
        %1409 = vmatpush1.msra.mxu0 0.0
        %1410 = vmatprep.subr.mxu0 0.0
        %1411 = vmatpush1.msra.mxu0 0.0
        %1412 = vmatprep.subr.mxu0 0.0
        %1413 = vmatpush1.msra.mxu0 0.0
        %1414 = vmatprep.subr.mxu0 0.0
        %1415 = vmatpush1.msra.mxu0 0.0
        %1416 = vmatprep.subr.mxu0 0.0
        %1417 = vmatpush1.msra.mxu0 0.0
        %1418 = vmatprep.subr.mxu0 0.0
        %1419 = vmatpush1.msra.mxu0 0.0
        %1420 = vmatprep.subr.mxu0 0.0
        %1421 = vmatpush1.msra.mxu0 %v1275
        %1422 = vmatprep.subr.mxu0 0.0
        %1423 = vmatpush2.msra.mxu0 0.0
        %1424 = vmatprep.subr.mxu0 0.0
        %1425 = vmatpush2.msra.mxu0 0.0
        %1426 = vmatprep.subr.mxu0 0.0
        %1427 = vmatpush2.msra.mxu0 0.0
        %1428 = vmatprep.subr.mxu0 0.0
        %1429 = vmatpush2.msra.mxu0 0.0
        %1430 = vmatprep.subr.mxu0 0.0
        %1431 = vmatpush2.msra.mxu0 0.0
        %1432 = vmatprep.subr.mxu0 0.0
        %1433 = vmatpush2.msra.mxu0 0.0
        %1434 = vmatprep.subr.mxu0 0.0
        %1435 = vmatpush2.msra.mxu0 0.0
        %1436 = vmatprep.subr.mxu0 0.0
        %1437 = vmatpush2.msra.mxu0 0.0
        %1438 = vmatprep.subr.mxu0 0.0
        %1439 = vmatpush2.msra.mxu0 0.0
        %1440 = vmatprep.subr.mxu0 0.0
        %1441 = vmatpush2.msra.mxu0 0.0
        %1442 = vmatprep.subr.mxu0 0.0
        %1443 = vmatpush2.msra.mxu0 0.0
        %1444 = vmatprep.subr.mxu0 0.0
        %1445 = vmatpush2.msra.mxu0 0.0
        %1446 = vmatprep.subr.mxu0 0.0
        %1447 = vmatpush2.msra.mxu0 0.0
        %1448 = vmatprep.subr.mxu0 0.0
        %1449 = vmatpush2.msra.mxu0 0.0
        %1450 = vmatprep.subr.mxu0 0.0
        %1451 = vmatpush2.msra.mxu0 0.0
        %1452 = vmatprep.subr.mxu0 0.0
        %1453 = vmatpush2.msra.mxu0 0.0
        %1454 = vmatprep.mubr.f32.mxu0 0.0
        %1455 = vmatmul.mubr.f32.gmra.mxu0 %v1379
        %v1456 = vpop.f32.mrf.mxu0
        %v1457 = vadd.f32 0.0, %v1456
        %v1458 = vpop.f32.mrf.mxu0
        %1459 = vmatprep.mubr.f32.mxu0 0.0
        %1460 = vmatmul.mubr.f32.gmra.mxu0 %v1382
        %v1461 = vpop.f32.mrf.mxu0
        %v1462 = vadd.f32 0.0, %v1461
        %v1463 = vpop.f32.mrf.mxu0
        %1464 = vmatprep.mubr.f32.mxu0 0.0
        %1465 = vmatmul.mubr.f32.gmra.mxu0 %v1385
        %v1466 = vpop.f32.mrf.mxu0
        %v1467 = vadd.f32 0.0, %v1466
        %v1468 = vpop.f32.mrf.mxu0
        %1469 = vmatprep.mubr.f32.mxu0 0.0
        %1470 = vmatmul.mubr.f32.gmra.mxu0 %v1388
        %v1471 = vpop.f32.mrf.mxu0
        %v1472 = vadd.f32 0.0, %v1471
        %v1473 = vpop.f32.mrf.mxu0
        %1474 = vdwg.mxu0
        %v1475 = vld [vmem:[%s20] sm:$0xff]
        %v1476 = vld [vmem:[%s20 + $0x8] sm:$0xff]
        %v1477 = vld [vmem:[%s21] sm:$0x1]
        %v1479 = vlaneseq
        %v1480 = vshrl.u32 %v1479, 7
        %v1481 = vsub.s32 0, %v1480
        %v1482 = vrot.slane %v1477, %v1481
        %vm1484 = vcmask 130048
        %v1486 = vsel %vm1484, %v1027, 0
        %v1489 = vsel %vm1484, %v1028, 0
        %v1492 = vsel %vm1484, %v1029, 0
        %v1495 = vsel %vm1484, %v1030, 0
        %1497 = vmatprep.subr.mxu0 0.0
        %1498 = vmatpush1.msra.mxu0 0.0
        %1499 = vmatprep.subr.mxu0 0.0
        %1500 = vmatpush1.msra.mxu0 0.0
        %1501 = vmatprep.subr.mxu0 0.0
        %1502 = vmatpush1.msra.mxu0 0.0
        %1503 = vmatprep.subr.mxu0 0.0
        %1504 = vmatpush1.msra.mxu0 0.0
        %1505 = vmatprep.subr.mxu0 0.0
        %1506 = vmatpush1.msra.mxu0 0.0
        %1507 = vmatprep.subr.mxu0 0.0
        %1508 = vmatpush1.msra.mxu0 0.0
        %1509 = vmatprep.subr.mxu0 0.0
        %1510 = vmatpush1.msra.mxu0 0.0
        %1511 = vmatprep.subr.mxu0 0.0
        %1512 = vmatpush1.msra.mxu0 0.0
        %1513 = vmatprep.subr.mxu0 0.0
        %1514 = vmatpush1.msra.mxu0 0.0
        %1515 = vmatprep.subr.mxu0 0.0
        %1516 = vmatpush1.msra.mxu0 0.0
        %1517 = vmatprep.subr.mxu0 0.0
        %1518 = vmatpush1.msra.mxu0 0.0
        %1519 = vmatprep.subr.mxu0 0.0
        %1520 = vmatpush1.msra.mxu0 0.0
        %1521 = vmatprep.subr.mxu0 0.0
        %1522 = vmatpush1.msra.mxu0 0.0
        %1523 = vmatprep.subr.mxu0 0.0
        %1524 = vmatpush1.msra.mxu0 0.0
        %1525 = vmatprep.subr.mxu0 0.0
        %1526 = vmatpush1.msra.mxu0 %v1476
        %1527 = vmatprep.subr.mxu0 0.0
        %1528 = vmatpush1.msra.mxu0 %v1475
        %1529 = vmatprep.subr.mxu0 0.0
        %1530 = vmatpush2.msra.mxu0 0.0
        %1531 = vmatprep.subr.mxu0 0.0
        %1532 = vmatpush2.msra.mxu0 0.0
        %1533 = vmatprep.subr.mxu0 0.0
        %1534 = vmatpush2.msra.mxu0 0.0
        %1535 = vmatprep.subr.mxu0 0.0
        %1536 = vmatpush2.msra.mxu0 0.0
        %1537 = vmatprep.subr.mxu0 0.0
        %1538 = vmatpush2.msra.mxu0 0.0
        %1539 = vmatprep.subr.mxu0 0.0
        %1540 = vmatpush2.msra.mxu0 0.0
        %1541 = vmatprep.subr.mxu0 0.0
        %1542 = vmatpush2.msra.mxu0 0.0
        %1543 = vmatprep.subr.mxu0 0.0
        %1544 = vmatpush2.msra.mxu0 0.0
        %1545 = vmatprep.subr.mxu0 0.0
        %1546 = vmatpush2.msra.mxu0 0.0
        %1547 = vmatprep.subr.mxu0 0.0
        %1548 = vmatpush2.msra.mxu0 0.0
        %1549 = vmatprep.subr.mxu0 0.0
        %1550 = vmatpush2.msra.mxu0 0.0
        %1551 = vmatprep.subr.mxu0 0.0
        %1552 = vmatpush2.msra.mxu0 0.0
        %1553 = vmatprep.subr.mxu0 0.0
        %1554 = vmatpush2.msra.mxu0 0.0
        %1555 = vmatprep.subr.mxu0 0.0
        %1556 = vmatpush2.msra.mxu0 0.0
        %1557 = vmatprep.subr.mxu0 0.0
        %1558 = vmatpush2.msra.mxu0 0.0
        %1559 = vmatprep.subr.mxu0 0.0
        %1560 = vmatpush2.msra.mxu0 0.0
        %1561 = vmatprep.mubr.f32.mxu0 0.0
        %1562 = vmatmul.mubr.f32.gmra.mxu0 %v1486
        %v1563 = vpop.f32.mrf.mxu0
        %v1564 = vadd.f32 %v1482, %v1563
        %v1565 = vpop.f32.mrf.mxu0
        %1566 = vmatprep.mubr.f32.mxu0 0.0
        %1567 = vmatmul.mubr.f32.gmra.mxu0 %v1489
        %v1568 = vpop.f32.mrf.mxu0
        %v1569 = vadd.f32 %v1482, %v1568
        %v1570 = vpop.f32.mrf.mxu0
        %1571 = vmatprep.mubr.f32.mxu0 0.0
        %1572 = vmatmul.mubr.f32.gmra.mxu0 %v1492
        %v1573 = vpop.f32.mrf.mxu0
        %v1574 = vadd.f32 %v1482, %v1573
        %v1575 = vpop.f32.mrf.mxu0
        %1576 = vmatprep.mubr.f32.mxu0 0.0
        %1577 = vmatmul.mubr.f32.gmra.mxu0 %v1495
        %v1578 = vpop.f32.mrf.mxu0
        %v1579 = vadd.f32 %v1482, %v1578
        %v1580 = vpop.f32.mrf.mxu0
        %1581 = vdwg.mxu0
        %v1582 = vmul.f32 %v1031, 0.2
        %v1583 = vmul.f32 %v1032, 0.2
        %v1584 = vmul.f32 %v1033, 0.2
        %v1585 = vmul.f32 %v1034, 0.2
        %v1586 = vmul.f32 %v1582, %v1582
        %v1587 = vmul.f32 %v1583, %v1583
        %v1588 = vmul.f32 %v1584, %v1584
        %v1589 = vmul.f32 %v1585, %v1585
        %v1590 = vmul.f32 %v1586, %v1586
        %v1591 = vmul.f32 %v1587, %v1587
        %v1592 = vmul.f32 %v1588, %v1588
        %v1593 = vmul.f32 %v1589, %v1589
        %v1594 = vmul.f32 %v1590, %v1590
        %v1595 = vmul.f32 %v1591, %v1591
        %v1596 = vmul.f32 %v1592, %v1592
        %v1597 = vmul.f32 %v1593, %v1593
        %v1598 = vmul.f32 %v1582, %v1594
        %v1599 = vmul.f32 %v1583, %v1595
        %v1600 = vmul.f32 %v1584, %v1596
        %v1601 = vmul.f32 %v1585, %v1597
        %v1602 = vmul.f32 %v1598, %v1582
        %v1603 = vmul.f32 %v1599, %v1583
        %v1604 = vmul.f32 %v1600, %v1584
        %v1605 = vmul.f32 %v1601, %v1585
        %v1606 = vmul.f32 %v1602, %v1582
        %v1607 = vmul.f32 %v1603, %v1583
        %v1608 = vmul.f32 %v1604, %v1584
        %v1609 = vmul.f32 %v1605, %v1585
        %v1610 = vmul.f32 %v1598, 55.0
        %v1611 = vmul.f32 %v1599, 55.0
        %v1612 = vmul.f32 %v1600, 55.0
        %v1613 = vmul.f32 %v1601, 55.0
        %v1614 = vsub.f32 1.0, %v1610
        %v1615 = vsub.f32 1.0, %v1611
        %v1616 = vsub.f32 1.0, %v1612
        %v1617 = vsub.f32 1.0, %v1613
        %v1618 = vmul.f32 %v1602, 99.0
        %v1619 = vmul.f32 %v1603, 99.0
        %v1620 = vmul.f32 %v1604, 99.0
        %v1621 = vmul.f32 %v1605, 99.0
        %v1622 = vadd.f32 %v1614, %v1618
        %v1623 = vadd.f32 %v1615, %v1619
        %v1624 = vadd.f32 %v1616, %v1620
        %v1625 = vadd.f32 %v1617, %v1621
        %v1626 = vmul.f32 %v1606, 45.0
        %v1627 = vmul.f32 %v1607, 45.0
        %v1628 = vmul.f32 %v1608, 45.0
        %v1629 = vmul.f32 %v1609, 45.0
        %v1630 = vsub.f32 %v1622, %v1626
        %v1631 = vsub.f32 %v1623, %v1627
        %v1632 = vsub.f32 %v1624, %v1628
        %v1633 = vsub.f32 %v1625, %v1629
        %vm1634 = vcmp.lt.f32.partialorder %v1031, 5.0
        %vm1635 = vcmp.lt.f32.partialorder %v1032, 5.0
        %vm1636 = vcmp.lt.f32.partialorder %v1033, 5.0
        %vm1637 = vcmp.lt.f32.partialorder %v1034, 5.0
        %v1638 = vsel %vm1634, 1, 0
        %v1639 = vsel %vm1635, 1, 0
        %v1640 = vsel %vm1636, 1, 0
        %v1641 = vsel %vm1637, 1, 0
        %v1642 = vcvt.s32.f32 %v1638
        %v1643 = vcvt.s32.f32 %v1639
        %v1644 = vcvt.s32.f32 %v1640
        %v1645 = vcvt.s32.f32 %v1641
        %v1646 = vmul.f32 %v1630, %v1642
        %v1647 = vmul.f32 %v1631, %v1643
        %v1648 = vmul.f32 %v1632, %v1644
        %v1649 = vmul.f32 %v1633, %v1645
        %v1650 = vmul.f32 %v1457, %v1356
        %v1651 = vmul.f32 %v1462, %v1361
        %v1652 = vmul.f32 %v1467, %v1366
        %v1653 = vmul.f32 %v1472, %v1371
        %1655 = vset.pattern.permute.xlu0 0
        %1656 = vperm.xlu0 %1655, %v1646
        %v1657 = vpop.permute.xlu0 %1656
        %1660 = vset.pattern.permute.xlu0 0
        %1661 = vperm.xlu0 %1660, %v1647
        %v1662 = vpop.permute.xlu0 %1661
        %1665 = vset.pattern.permute.xlu0 0
        %1666 = vperm.xlu0 %1665, %v1648
        %v1667 = vpop.permute.xlu0 %1666
        %1670 = vset.pattern.permute.xlu0 0
        %1671 = vperm.xlu0 %1670, %v1649
        %v1672 = vpop.permute.xlu0 %1671
        %v1674 = vmul.f32 %v1564, %v1657
        %v1675 = vmul.f32 %v1569, %v1662
        %v1676 = vmul.f32 %v1574, %v1667
        %v1677 = vmul.f32 %v1579, %v1672
        %v1678 = vmul.f32 %v1650, %v1674
        %v1679 = vmul.f32 %v1651, %v1675
        %v1680 = vmul.f32 %v1652, %v1676
        %v1681 = vmul.f32 %v1653, %v1677
        %v1682 = vld [vmem:[%s16] sm:$0xff]
        %v1683 = vld [vmem:[%s16 + $0x8] sm:$0xff]
        %v1684 = vld [vmem:[%s16 + $0x10] sm:$0xff]
        %v1685 = vld [vmem:[%s16 + $0x18] sm:$0xff]
        %v1686 = vld [vmem:[%s17] sm:$0x1]
        %v1688 = vlaneseq
        %v1689 = vshrl.u32 %v1688, 7
        %v1690 = vsub.s32 0, %v1689
        %v1691 = vrot.slane %v1686, %v1690
        %v1694 = vsel %vm1050, %v1678, 0
        %v1697 = vsel %vm1050, %v1679, 0
        %v1700 = vsel %vm1050, %v1680, 0
        %v1703 = vsel %vm1050, %v1681, 0
        %1705 = vmatprep.subr.mxu0 0.0
        %1706 = vmatpush1.msra.mxu0 0.0
        %1707 = vmatprep.subr.mxu0 0.0
        %1708 = vmatpush1.msra.mxu0 0.0
        %1709 = vmatprep.subr.mxu0 0.0
        %1710 = vmatpush1.msra.mxu0 0.0
        %1711 = vmatprep.subr.mxu0 0.0
        %1712 = vmatpush1.msra.mxu0 0.0
        %1713 = vmatprep.subr.mxu0 0.0
        %1714 = vmatpush1.msra.mxu0 0.0
        %1715 = vmatprep.subr.mxu0 0.0
        %1716 = vmatpush1.msra.mxu0 0.0
        %1717 = vmatprep.subr.mxu0 0.0
        %1718 = vmatpush1.msra.mxu0 0.0
        %1719 = vmatprep.subr.mxu0 0.0
        %1720 = vmatpush1.msra.mxu0 0.0
        %1721 = vmatprep.subr.mxu0 0.0
        %1722 = vmatpush1.msra.mxu0 0.0
        %1723 = vmatprep.subr.mxu0 0.0
        %1724 = vmatpush1.msra.mxu0 0.0
        %1725 = vmatprep.subr.mxu0 0.0
        %1726 = vmatpush1.msra.mxu0 0.0
        %1727 = vmatprep.subr.mxu0 0.0
        %1728 = vmatpush1.msra.mxu0 0.0
        %1729 = vmatprep.subr.mxu0 0.0
        %1730 = vmatpush1.msra.mxu0 %v1685
        %1731 = vmatprep.subr.mxu0 0.0
        %1732 = vmatpush1.msra.mxu0 %v1684
        %1733 = vmatprep.subr.mxu0 0.0
        %1734 = vmatpush1.msra.mxu0 %v1683
        %1735 = vmatprep.subr.mxu0 0.0
        %1736 = vmatpush1.msra.mxu0 %v1682
        %1737 = vmatprep.subr.mxu0 0.0
        %1738 = vmatpush2.msra.mxu0 0.0
        %1739 = vmatprep.subr.mxu0 0.0
        %1740 = vmatpush2.msra.mxu0 0.0
        %1741 = vmatprep.subr.mxu0 0.0
        %1742 = vmatpush2.msra.mxu0 0.0
        %1743 = vmatprep.subr.mxu0 0.0
        %1744 = vmatpush2.msra.mxu0 0.0
        %1745 = vmatprep.subr.mxu0 0.0
        %1746 = vmatpush2.msra.mxu0 0.0
        %1747 = vmatprep.subr.mxu0 0.0
        %1748 = vmatpush2.msra.mxu0 0.0
        %1749 = vmatprep.subr.mxu0 0.0
        %1750 = vmatpush2.msra.mxu0 0.0
        %1751 = vmatprep.subr.mxu0 0.0
        %1752 = vmatpush2.msra.mxu0 0.0
        %1753 = vmatprep.subr.mxu0 0.0
        %1754 = vmatpush2.msra.mxu0 0.0
        %1755 = vmatprep.subr.mxu0 0.0
        %1756 = vmatpush2.msra.mxu0 0.0
        %1757 = vmatprep.subr.mxu0 0.0
        %1758 = vmatpush2.msra.mxu0 0.0
        %1759 = vmatprep.subr.mxu0 0.0
        %1760 = vmatpush2.msra.mxu0 0.0
        %1761 = vmatprep.subr.mxu0 0.0
        %1762 = vmatpush2.msra.mxu0 0.0
        %1763 = vmatprep.subr.mxu0 0.0
        %1764 = vmatpush2.msra.mxu0 0.0
        %1765 = vmatprep.subr.mxu0 0.0
        %1766 = vmatpush2.msra.mxu0 0.0
        %1767 = vmatprep.subr.mxu0 0.0
        %1768 = vmatpush2.msra.mxu0 0.0
        %1769 = vmatprep.mubr.f32.mxu0 0.0
        %1770 = vmatmul.mubr.f32.gmra.mxu0 %v1694
        %v1771 = vpop.f32.mrf.mxu0
        %v1772 = vadd.f32 %v1691, %v1771
        %v1773 = vpop.f32.mrf.mxu0
        %1774 = vmatprep.mubr.f32.mxu0 0.0
        %1775 = vmatmul.mubr.f32.gmra.mxu0 %v1697
        %v1776 = vpop.f32.mrf.mxu0
        %v1777 = vadd.f32 %v1691, %v1776
        %v1778 = vpop.f32.mrf.mxu0
        %1779 = vmatprep.mubr.f32.mxu0 0.0
        %1780 = vmatmul.mubr.f32.gmra.mxu0 %v1700
        %v1781 = vpop.f32.mrf.mxu0
        %v1782 = vadd.f32 %v1691, %v1781
        %v1783 = vpop.f32.mrf.mxu0
        %1784 = vmatprep.mubr.f32.mxu0 0.0
        %1785 = vmatmul.mubr.f32.gmra.mxu0 %v1703
        %v1786 = vpop.f32.mrf.mxu0
        %v1787 = vadd.f32 %v1691, %v1786
        %v1788 = vpop.f32.mrf.mxu0
        %1789 = vdwg.mxu0
        %v1790 = vxor.u32 %v1772, 2147483648
        %v1791 = vxor.u32 %v1777, 2147483648
        %v1792 = vxor.u32 %v1782, 2147483648
        %v1793 = vxor.u32 %v1787, 2147483648
        %v1794 = vmul.f32 %v1790, 1.442695
        %v1795 = vpow.pop %v1794
        %v1796 = vmul.f32 %v1791, 1.442695
        %v1797 = vpow.pop %v1796
        %v1798 = vmul.f32 %v1792, 1.442695
        %v1799 = vpow.pop %v1798
        %v1800 = vmul.f32 %v1793, 1.442695
        %v1801 = vpow.pop %v1800
        %v1802 = vadd.f32 %v1795, 1.0
        %v1803 = vadd.f32 %v1797, 1.0
        %v1804 = vadd.f32 %v1799, 1.0
        %v1805 = vadd.f32 %v1801, 1.0
        %v1806 = vrcp.pop %v1802
        %v1807 = vmul.f32 1.0, %v1806
        %v1808 = vrcp.pop %v1803
        %v1809 = vmul.f32 1.0, %v1808
        %v1810 = vrcp.pop %v1804
        %v1811 = vmul.f32 1.0, %v1810
        %v1812 = vrcp.pop %v1805
        %v1813 = vmul.f32 1.0, %v1812
        %v1814 = vmul.f32 %v1772, %v1807
        %v1815 = vmul.f32 %v1777, %v1809
        %v1816 = vmul.f32 %v1782, %v1811
        %v1817 = vmul.f32 %v1787, %v1813
        %v1818 = vld [vmem:[%s18] sm:$0xff]
        %v1819 = vld [vmem:[%s18 + $0x8] sm:$0xff]
        %v1820 = vld [vmem:[%s18 + $0x10] sm:$0xff]
        %v1821 = vld [vmem:[%s18 + $0x18] sm:$0xff]
        %v1822 = vld [vmem:[%s18 + $0x20] sm:$0xff]
        %v1823 = vld [vmem:[%s18 + $0x28] sm:$0xff]
        %v1824 = vld [vmem:[%s18 + $0x30] sm:$0xff]
        %v1825 = vld [vmem:[%s18 + $0x38] sm:$0xff]
        %v1826 = vld [vmem:[%s19] sm:$0x1]
        %v1828 = vlaneseq
        %v1829 = vshrl.u32 %v1828, 7
        %v1830 = vsub.s32 0, %v1829
        %v1831 = vrot.slane %v1826, %v1830
        %vm1833 = vcmask 523264
        %v1835 = vsel %vm1833, %v1814, 0
        %v1838 = vsel %vm1833, %v1815, 0
        %v1841 = vsel %vm1833, %v1816, 0
        %v1844 = vsel %vm1833, %v1817, 0
        %1846 = vmatprep.subr.mxu0 0.0
        %1847 = vmatpush1.msra.mxu0 0.0
        %1848 = vmatprep.subr.mxu0 0.0
        %1849 = vmatpush1.msra.mxu0 0.0
        %1850 = vmatprep.subr.mxu0 0.0
        %1851 = vmatpush1.msra.mxu0 0.0
        %1852 = vmatprep.subr.mxu0 0.0
        %1853 = vmatpush1.msra.mxu0 0.0
        %1854 = vmatprep.subr.mxu0 0.0
        %1855 = vmatpush1.msra.mxu0 0.0
        %1856 = vmatprep.subr.mxu0 0.0
        %1857 = vmatpush1.msra.mxu0 0.0
        %1858 = vmatprep.subr.mxu0 0.0
        %1859 = vmatpush1.msra.mxu0 0.0
        %1860 = vmatprep.subr.mxu0 0.0
        %1861 = vmatpush1.msra.mxu0 0.0
        %1862 = vmatprep.subr.mxu0 0.0
        %1863 = vmatpush1.msra.mxu0 %v1825
        %1864 = vmatprep.subr.mxu0 0.0
        %1865 = vmatpush1.msra.mxu0 %v1824
        %1866 = vmatprep.subr.mxu0 0.0
        %1867 = vmatpush1.msra.mxu0 %v1823
        %1868 = vmatprep.subr.mxu0 0.0
        %1869 = vmatpush1.msra.mxu0 %v1822
        %1870 = vmatprep.subr.mxu0 0.0
        %1871 = vmatpush1.msra.mxu0 %v1821
        %1872 = vmatprep.subr.mxu0 0.0
        %1873 = vmatpush1.msra.mxu0 %v1820
        %1874 = vmatprep.subr.mxu0 0.0
        %1875 = vmatpush1.msra.mxu0 %v1819
        %1876 = vmatprep.subr.mxu0 0.0
        %1877 = vmatpush1.msra.mxu0 %v1818
        %1878 = vmatprep.subr.mxu0 0.0
        %1879 = vmatpush2.msra.mxu0 0.0
        %1880 = vmatprep.subr.mxu0 0.0
        %1881 = vmatpush2.msra.mxu0 0.0
        %1882 = vmatprep.subr.mxu0 0.0
        %1883 = vmatpush2.msra.mxu0 0.0
        %1884 = vmatprep.subr.mxu0 0.0
        %1885 = vmatpush2.msra.mxu0 0.0
        %1886 = vmatprep.subr.mxu0 0.0
        %1887 = vmatpush2.msra.mxu0 0.0
        %1888 = vmatprep.subr.mxu0 0.0
        %1889 = vmatpush2.msra.mxu0 0.0
        %1890 = vmatprep.subr.mxu0 0.0
        %1891 = vmatpush2.msra.mxu0 0.0
        %1892 = vmatprep.subr.mxu0 0.0
        %1893 = vmatpush2.msra.mxu0 0.0
        %1894 = vmatprep.subr.mxu0 0.0
        %1895 = vmatpush2.msra.mxu0 0.0
        %1896 = vmatprep.subr.mxu0 0.0
        %1897 = vmatpush2.msra.mxu0 0.0
        %1898 = vmatprep.subr.mxu0 0.0
        %1899 = vmatpush2.msra.mxu0 0.0
        %1900 = vmatprep.subr.mxu0 0.0
        %1901 = vmatpush2.msra.mxu0 0.0
        %1902 = vmatprep.subr.mxu0 0.0
        %1903 = vmatpush2.msra.mxu0 0.0
        %1904 = vmatprep.subr.mxu0 0.0
        %1905 = vmatpush2.msra.mxu0 0.0
        %1906 = vmatprep.subr.mxu0 0.0
        %1907 = vmatpush2.msra.mxu0 0.0
        %1908 = vmatprep.subr.mxu0 0.0
        %1909 = vmatpush2.msra.mxu0 0.0
        %1910 = vmatprep.mubr.f32.mxu0 0.0
        %1911 = vmatmul.mubr.f32.gmra.mxu0 %v1835
        %v1912 = vpop.f32.mrf.mxu0
        %v1913 = vadd.f32 %v1831, %v1912
        %v1914 = vpop.f32.mrf.mxu0
        %1915 = vmatprep.mubr.f32.mxu0 0.0
        %1916 = vmatmul.mubr.f32.gmra.mxu0 %v1838
        %v1917 = vpop.f32.mrf.mxu0
        %v1918 = vadd.f32 %v1831, %v1917
        %v1919 = vpop.f32.mrf.mxu0
        %1920 = vmatprep.mubr.f32.mxu0 0.0
        %1921 = vmatmul.mubr.f32.gmra.mxu0 %v1841
        %v1922 = vpop.f32.mrf.mxu0
        %v1923 = vadd.f32 %v1831, %v1922
        %v1924 = vpop.f32.mrf.mxu0
        %1925 = vmatprep.mubr.f32.mxu0 0.0
        %1926 = vmatmul.mubr.f32.gmra.mxu0 %v1844
        %v1927 = vpop.f32.mrf.mxu0
        %v1928 = vadd.f32 %v1831, %v1927
        %v1929 = vpop.f32.mrf.mxu0
        %1930 = vdwg.mxu0
        %1935 = vrot.lane.b32.xlu0 %v1913, 96
        %v1936 = vpop.permute.xlu0 %1935
        %1937 = vrot.lane.b32.xlu0 %v1918, 96
        %v1938 = vpop.permute.xlu0 %1937
        %1939 = vrot.lane.b32.xlu0 %v1923, 96
        %v1940 = vpop.permute.xlu0 %1939
        %1941 = vrot.lane.b32.xlu0 %v1928, 96
        %v1942 = vpop.permute.xlu0 %1941
        %v1947 = vadd.f32 %v1023, %v1936
        %v1948 = vadd.f32 %v1024, %v1938
        %v1949 = vadd.f32 %v1025, %v1940
        %v1950 = vadd.f32 %v1026, %v1942
        %1951 = vst.msk [vmem:[%s1014] sm:$0xff] %vm1229, %v1947
        %1952 = vst.msk [vmem:[%s1014 + $0x8] sm:$0xff] %vm1229, %v1948
        %1953 = vst.msk [vmem:[%s1014 + $0x10] sm:$0xff] %vm1229, %v1949
        %1954 = vst.msk [vmem:[%s1014 + $0x18] sm:$0xff] %vm1229, %v1950
        %1955 = vset.pattern.permute.xlu0 32
        %1956 = vperm.xlu0 %1955, %v1913
        %v1957 = vpop.permute.xlu0 %1956
        %1959 = vset.pattern.permute.xlu0 32
        %1960 = vperm.xlu0 %1959, %v1918
        %v1961 = vpop.permute.xlu0 %1960
        %1963 = vset.pattern.permute.xlu0 32
        %1964 = vperm.xlu0 %1963, %v1923
        %v1965 = vpop.permute.xlu0 %1964
        %1967 = vset.pattern.permute.xlu0 32
        %1968 = vperm.xlu0 %1967, %v1928
        %v1969 = vpop.permute.xlu0 %1968
        %v1971 = vmul.f32 %v1957, %v1913
        %v1972 = vmul.f32 %v1961, %v1918
        %v1973 = vmul.f32 %v1965, %v1923
        %v1974 = vmul.f32 %v1969, %v1928
        %v1975 = vadd.f32 %v1017, %v1971
        %v1976 = vadd.f32 %v1018, %v1972
        %v1977 = vadd.f32 %v1019, %v1973
        %v1978 = vadd.f32 %v1020, %v1974
        %1979 = vst.msk [vmem:[%s944] sm:$0xff] %vm1050, %v1975
        %1980 = vst.msk [vmem:[%s944 + $0x8] sm:$0xff] %vm1050, %v1976
        %1981 = vst.msk [vmem:[%s944 + $0x10] sm:$0xff] %vm1050, %v1977
        %1982 = vst.msk [vmem:[%s944 + $0x18] sm:$0xff] %vm1050, %v1978
        %vm1983 = vcmp.eq.f32.partialorder %v1031, 0.0
        %vm1984 = vcmp.eq.f32.partialorder %v1032, 0.0
        %vm1985 = vcmp.eq.f32.partialorder %v1033, 0.0
        %vm1986 = vcmp.eq.f32.partialorder %v1034, 0.0
        %v1987 = vrcp.pop %v1031
        %v1988 = vrcp.pop %v1032
        %v1989 = vrcp.pop %v1033
        %v1990 = vrcp.pop %v1034
        %v1991 = vsel %vm1983, 0.0, %v1987
        %v1992 = vsel %vm1984, 0.0, %v1988
        %v1993 = vsel %vm1985, 0.0, %v1989
        %v1994 = vsel %vm1986, 0.0, %v1990
        %1999 = vrot.lane.b32.xlu0 %v1975, 32
        %v2000 = vpop.permute.xlu0 %1999
        %2001 = vrot.lane.b32.xlu0 %v1976, 32
        %v2002 = vpop.permute.xlu0 %2001
        %2003 = vrot.lane.b32.xlu0 %v1977, 32
        %v2004 = vpop.permute.xlu0 %2003
        %2005 = vrot.lane.b32.xlu0 %v1978, 32
        %v2006 = vpop.permute.xlu0 %2005
        %v2011 = vsub.f32 %v1650, %v2000
        %v2012 = vsub.f32 %v1651, %v2002
        %v2013 = vsub.f32 %v1652, %v2004
        %v2014 = vsub.f32 %v1653, %v2006
        %2016 = vset.pattern.permute.xlu0 0
        %2017 = vperm.xlu0 %2016, %v1991
        %v2018 = vpop.permute.xlu0 %2017
        %2021 = vset.pattern.permute.xlu0 0
        %2022 = vperm.xlu0 %2021, %v1992
        %v2023 = vpop.permute.xlu0 %2022
        %2026 = vset.pattern.permute.xlu0 0
        %2027 = vperm.xlu0 %2026, %v1993
        %v2028 = vpop.permute.xlu0 %2027
        %2031 = vset.pattern.permute.xlu0 0
        %2032 = vperm.xlu0 %2031, %v1994
        %v2033 = vpop.permute.xlu0 %2032
        %v2035 = vmul.f32 %v2018, %v2011
        %v2036 = vmul.f32 %v2023, %v2012
        %v2037 = vmul.f32 %v2028, %v2013
        %v2038 = vmul.f32 %v2033, %v2014
        %v2039 = vld [vmem:[%s11] sm:$0xff]
        %2044 = vrot.lane.b32.xlu0 %v2035, 96
        %v2045 = vpop.permute.xlu0 %2044
        %2046 = vrot.lane.b32.xlu0 %v2036, 96
        %v2047 = vpop.permute.xlu0 %2046
        %2048 = vrot.lane.b32.xlu0 %v2037, 96
        %v2049 = vpop.permute.xlu0 %2048
        %2050 = vrot.lane.b32.xlu0 %v2038, 96
        %v2051 = vpop.permute.xlu0 %2050
        %v2057 = vsel %vm1050, %v2039, 0
        %2059 = vmatprep.subr.mxu0 0.0
        %2060 = vmatpush1.msra.mxu0 0.0
        %2061 = vmatprep.subr.mxu0 0.0
        %2062 = vmatpush1.msra.mxu0 0.0
        %2063 = vmatprep.subr.mxu0 0.0
        %2064 = vmatpush1.msra.mxu0 0.0
        %2065 = vmatprep.subr.mxu0 0.0
        %2066 = vmatpush1.msra.mxu0 0.0
        %2067 = vmatprep.subr.mxu0 0.0
        %2068 = vmatpush1.msra.mxu0 0.0
        %2069 = vmatprep.subr.mxu0 0.0
        %2070 = vmatpush1.msra.mxu0 0.0
        %2071 = vmatprep.subr.mxu0 0.0
        %2072 = vmatpush1.msra.mxu0 0.0
        %2073 = vmatprep.subr.mxu0 0.0
        %2074 = vmatpush1.msra.mxu0 0.0
        %2075 = vmatprep.subr.mxu0 0.0
        %2076 = vmatpush1.msra.mxu0 0.0
        %2077 = vmatprep.subr.mxu0 0.0
        %2078 = vmatpush1.msra.mxu0 0.0
        %2079 = vmatprep.subr.mxu0 0.0
        %2080 = vmatpush1.msra.mxu0 0.0
        %2081 = vmatprep.subr.mxu0 0.0
        %2082 = vmatpush1.msra.mxu0 0.0
        %2083 = vmatprep.subr.mxu0 0.0
        %2084 = vmatpush1.msra.mxu0 %v2051
        %2085 = vmatprep.subr.mxu0 0.0
        %2086 = vmatpush1.msra.mxu0 %v2049
        %2087 = vmatprep.subr.mxu0 0.0
        %2088 = vmatpush1.msra.mxu0 %v2047
        %2089 = vmatprep.subr.mxu0 0.0
        %2090 = vmatpush1.msra.mxu0 %v2045
        %2091 = vmatprep.subr.mxu0 0.0
        %2092 = vmatpush2.msra.mxu0 0.0
        %2093 = vmatprep.subr.mxu0 0.0
        %2094 = vmatpush2.msra.mxu0 0.0
        %2095 = vmatprep.subr.mxu0 0.0
        %2096 = vmatpush2.msra.mxu0 0.0
        %2097 = vmatprep.subr.mxu0 0.0
        %2098 = vmatpush2.msra.mxu0 0.0
        %2099 = vmatprep.subr.mxu0 0.0
        %2100 = vmatpush2.msra.mxu0 0.0
        %2101 = vmatprep.subr.mxu0 0.0
        %2102 = vmatpush2.msra.mxu0 0.0
        %2103 = vmatprep.subr.mxu0 0.0
        %2104 = vmatpush2.msra.mxu0 0.0
        %2105 = vmatprep.subr.mxu0 0.0
        %2106 = vmatpush2.msra.mxu0 0.0
        %2107 = vmatprep.subr.mxu0 0.0
        %2108 = vmatpush2.msra.mxu0 0.0
        %2109 = vmatprep.subr.mxu0 0.0
        %2110 = vmatpush2.msra.mxu0 0.0
        %2111 = vmatprep.subr.mxu0 0.0
        %2112 = vmatpush2.msra.mxu0 0.0
        %2113 = vmatprep.subr.mxu0 0.0
        %2114 = vmatpush2.msra.mxu0 0.0
        %2115 = vmatprep.subr.mxu0 0.0
        %2116 = vmatpush2.msra.mxu0 0.0
        %2117 = vmatprep.subr.mxu0 0.0
        %2118 = vmatpush2.msra.mxu0 0.0
        %2119 = vmatprep.subr.mxu0 0.0
        %2120 = vmatpush2.msra.mxu0 0.0
        %2121 = vmatprep.subr.mxu0 0.0
        %2122 = vmatpush2.msra.mxu0 0.0
        %2123 = vmatprep.mubr.f32.mxu0 0.0
        %2124 = vmatmul.mubr.f32.gmra.mxu0 %v2057
        %v2125 = vpop.f32.mrf.mxu0
        %v2126 = vadd.f32 0.0, %v2125
        %v2127 = vpop.f32.mrf.mxu0
        %2128 = vdwg.mxu0
        %2130 = vrot.lane.b32.xlu0 %v2126, 64
        %v2131 = vpop.permute.xlu0 %2130
        %v2133 = vmul.f32 %v1221, %v2131
        %2135 = vrot.lane.b32.xlu0 %v2133, 64
        %v2136 = vpop.permute.xlu0 %2135
        %v2138 = vadd.f32 %v1015, %v2136
        %2139 = vst.msk [vmem:[%s930] sm:$0xff] %vm1050, %v2138
        %v2140 = vadd.f32 %v1021, %v2136
        %2141 = vst.msk [vmem:[%s951] sm:$0xff] %vm1050, %v2140
        %s2142 = sand.u32 %s563, 1
        %s2143 = scalar_lea.sflag [#allocation3], %s2142
        %s2144 = sand.u32 %s563, 1
        %s2145 = smul.addr %s2144, 8
        %s2146 = scalar_lea.vmem [#allocation2], %s2145
        %s2147 = sand.u32 %s48, 1
        %s2148 = scalar_lea.sflag [#allocation5], %s2147
        %s2149 = sand.u32 %s589, 1
        %s2150 = smul.addr %s2149, 8
        %s2151 = scalar_lea.vmem [#allocation4], %s2150
        %s2152 = sand.u32 %s48, 1
        %s2153 = scalar_lea.sflag [#allocation5], %s2152
        %s2154 = sand.u32 %s615, 1
        %s2155 = smul.addr %s2154, 32
        %s2156 = scalar_lea.vmem [#allocation6], %s2155
        %s2157 = sand.u32 %s641, 1
        %s2158 = scalar_lea.sflag [#allocation8], %s2157
        %s2159 = sand.u32 %s641, 1
        %s2160 = smul.addr %s2159, 8
        %s2161 = scalar_lea.vmem [#allocation7], %s2160
        %p2162 = scmp.lt.s32.totalorder %s48, 1
        %s2163 = scalar_select %p2162, %s48, 1
        %s2164 = smul.addr %s2163, 8
        %s2165 = scalar_lea.vmem %s26, %s2164
        %p2166 = scmp.lt.s32.totalorder %s48, 1
        %s2167 = scalar_select %p2166, %s48, 1
        %s2168 = smul.addr %s2167, 4
        %s2169 = smul.addr %s2168, 8
        %s2170 = scalar_lea.vmem %s27, %s2169
        // Predicated region
        $region109: #{tpu_custom_call.1} parent=107 // pred_check
          %p2171 = pneg %p573
        $region110: #{tpu_custom_call.1} parent=107 // pred_check_branch
          %2173 = sbr.rel (%p2171) target = $region112
        $region111: #{tpu_custom_call.1} parent=107 // pred_region
          %s2175 = ssub.s32 128, 128
          %2176 = vsyncadd %s2143, %s2175
          %s2177 = smul.addr %s48, 128
          %s2178 = scalar_lea.hbm %s22, %s2177
          %s2180 = sshll.u32 %s2146, 4
          %s2181 = int_to_ptr.vmem [resolvable:$true] %s2180
          %2183 = dma.vmem_to_hbm [thread:$0]  %s2181, 128, %s2178, %s2143
        $region112: #{tpu_custom_call.1} parent=107 // pred_fallthru
          _
        // Predicated region
        $region113: #{tpu_custom_call.1} parent=107 // pred_check
          %p2184 = pneg %p599
        $region114: #{tpu_custom_call.1} parent=107 // pred_check_branch
          %2186 = sbr.rel (%p2184) target = $region116
        $region115: #{tpu_custom_call.1} parent=107 // pred_region
          %s2188 = ssub.s32 128, 128
          %2189 = vsyncadd %s2148, %s2188
          %s2190 = smul.addr %s48, 128
          %s2191 = scalar_lea.hbm %s23, %s2190
          %s2193 = sshll.u32 %s2151, 4
          %s2194 = int_to_ptr.vmem [resolvable:$true] %s2193
          %2196 = dma.vmem_to_hbm [thread:$0]  %s2194, 128, %s2191, %s2148
        $region116: #{tpu_custom_call.1} parent=107 // pred_fallthru
          _
        // Predicated region
        $region117: #{tpu_custom_call.1} parent=107 // pred_check
          %p2197 = pneg %p625
        $region118: #{tpu_custom_call.1} parent=107 // pred_check_branch
          %2199 = sbr.rel (%p2197) target = $region120
        $region119: #{tpu_custom_call.1} parent=107 // pred_region
          %s2201 = ssub.s32 512, 512
          %2202 = vsyncadd %s2153, %s2201
          %s2203 = smul.addr %s48, 4
          %s2204 = smul.addr %s2203, 128
          %s2205 = scalar_lea.hbm %s24, %s2204
          %s2206 = sshll.u32 %s2156, 4
          %s2207 = int_to_ptr.vmem [resolvable:$true] %s2206
          %2212 = dma.vmem_to_hbm [thread:$0]  %s2207, 512, %s2205, %s2153, 128, 128, 8
        $region120: #{tpu_custom_call.1} parent=107 // pred_fallthru
          _
        // Predicated region
        $region121: #{tpu_custom_call.1} parent=107 // pred_check
          %p2213 = pneg %p651
        $region122: #{tpu_custom_call.1} parent=107 // pred_check_branch
          %2215 = sbr.rel (%p2213) target = $region124
        $region123: #{tpu_custom_call.1} parent=107 // pred_region
          %s2217 = ssub.s32 128, 128
          %2218 = vsyncadd %s2158, %s2217
          %s2219 = smul.addr %s48, 128
          %s2220 = scalar_lea.hbm %s25, %s2219
          %s2222 = sshll.u32 %s2161, 4
          %s2223 = int_to_ptr.vmem [resolvable:$true] %s2222
          %2225 = dma.vmem_to_hbm [thread:$0]  %s2223, 128, %s2220, %s2158
        $region124: #{tpu_custom_call.1} parent=107 // pred_fallthru
          _
        // Predicated region
        $region125: #{tpu_custom_call.1} parent=107 // pred_check
          %p2226 = pneg %p677
        $region126: #{tpu_custom_call.1} parent=107 // pred_check_branch
          %2228 = sbr.rel (%p2226) target = $region128
        $region127: #{tpu_custom_call.1} parent=107 // pred_region
          _
        $region128: #{tpu_custom_call.1} parent=107 // pred_fallthru
          _
        // Predicated region
        $region129: #{tpu_custom_call.1} parent=107 // pred_check
          %p2229 = pneg %p703
        $region130: #{tpu_custom_call.1} parent=107 // pred_check_branch
          %2231 = sbr.rel (%p2229) target = $region132
        $region131: #{tpu_custom_call.1} parent=107 // pred_region
          _
        $region132: #{tpu_custom_call.1} parent=107 // pred_fallthru
          _
      $region108: #{tpu_custom_call.1} parent=5 // pred_fallthru
        _
      %p2232 = scmp.le.s32.totalorder 2, %s43
      // Predicated region
      $region133: #{tpu_custom_call.1} parent=5 // pred_check
        %p2233 = pneg %p2232
      $region134: #{tpu_custom_call.1} parent=5 // pred_check_branch
        %2235 = sbr.rel (%p2233) target = $region136
      $region135: #{tpu_custom_call.1} parent=5 // pred_region
        %s2236 = ssub.s32 %s43, 2
        // Predicated region
        $region137: #{tpu_custom_call.1} parent=135 // pred_check
          %p2237 = pneg %p579
        $region138: #{tpu_custom_call.1} parent=135 // pred_check_branch
          %2239 = sbr.rel (%p2237) target = $region140
        $region139: #{tpu_custom_call.1} parent=135 // pred_region
          %s2240 = sand.u32 %s564, 1
          %s2241 = scalar_lea.sflag [#allocation3], %s2240
          %s2242 = sand.u32 %s564, 1
          %s2243 = smul.addr %s2242, 8
          %s2244 = scalar_lea.vmem [#allocation2], %s2243
          %2245 = dma.done %s2241, 128
        $region140: #{tpu_custom_call.1} parent=135 // pred_fallthru
          _
        // Predicated region
        $region141: #{tpu_custom_call.1} parent=135 // pred_check
          %p2246 = pneg %p605
        $region142: #{tpu_custom_call.1} parent=135 // pred_check_branch
          %2248 = sbr.rel (%p2246) target = $region144
        $region143: #{tpu_custom_call.1} parent=135 // pred_region
          %s2249 = sand.u32 %s49, 1
          %s2250 = scalar_lea.sflag [#allocation5], %s2249
          %s2251 = sand.u32 %s590, 1
          %s2252 = smul.addr %s2251, 8
          %s2253 = scalar_lea.vmem [#allocation4], %s2252
          %2254 = dma.done %s2250, 128
        $region144: #{tpu_custom_call.1} parent=135 // pred_fallthru
          _
        // Predicated region
        $region145: #{tpu_custom_call.1} parent=135 // pred_check
          %p2255 = pneg %p631
        $region146: #{tpu_custom_call.1} parent=135 // pred_check_branch
          %2257 = sbr.rel (%p2255) target = $region148
        $region147: #{tpu_custom_call.1} parent=135 // pred_region
          %s2258 = sand.u32 %s49, 1
          %s2259 = scalar_lea.sflag [#allocation5], %s2258
          %s2260 = sand.u32 %s616, 1
          %s2261 = smul.addr %s2260, 32
          %s2262 = scalar_lea.vmem [#allocation6], %s2261
          %2263 = dma.done %s2259, 512
        $region148: #{tpu_custom_call.1} parent=135 // pred_fallthru
          _
        // Predicated region
        $region149: #{tpu_custom_call.1} parent=135 // pred_check
          %p2264 = pneg %p657
        $region150: #{tpu_custom_call.1} parent=135 // pred_check_branch
          %2266 = sbr.rel (%p2264) target = $region152
        $region151: #{tpu_custom_call.1} parent=135 // pred_region
          %s2267 = sand.u32 %s642, 1
          %s2268 = scalar_lea.sflag [#allocation8], %s2267
          %s2269 = sand.u32 %s642, 1
          %s2270 = smul.addr %s2269, 8
          %s2271 = scalar_lea.vmem [#allocation7], %s2270
          %2272 = dma.done %s2268, 128
        $region152: #{tpu_custom_call.1} parent=135 // pred_fallthru
          _
        // Predicated region
        $region153: #{tpu_custom_call.1} parent=135 // pred_check
          %p2273 = pneg %p683
        $region154: #{tpu_custom_call.1} parent=135 // pred_check_branch
          %2275 = sbr.rel (%p2273) target = $region156
        $region155: #{tpu_custom_call.1} parent=135 // pred_region
          %p2276 = scmp.lt.s32.totalorder %s49, 1
          %s2277 = scalar_select %p2276, %s49, 1
          %s2278 = smul.addr %s2277, 8
          %s2279 = scalar_lea.vmem %s26, %s2278
        $region156: #{tpu_custom_call.1} parent=135 // pred_fallthru
          _
        // Predicated region
        $region157: #{tpu_custom_call.1} parent=135 // pred_check
          %p2280 = pneg %p709
        $region158: #{tpu_custom_call.1} parent=135 // pred_check_branch
          %2282 = sbr.rel (%p2280) target = $region160
        $region159: #{tpu_custom_call.1} parent=135 // pred_region
          %p2283 = scmp.lt.s32.totalorder %s49, 1
          %s2284 = scalar_select %p2283, %s49, 1
          %s2285 = smul.addr %s2284, 4
          %s2286 = smul.addr %s2285, 8
          %s2287 = scalar_lea.vmem %s27, %s2286
        $region160: #{tpu_custom_call.1} parent=135 // pred_fallthru
          _
      $region136: #{tpu_custom_call.1} parent=5 // pred_fallthru
        _
    $region6: #{tpu_custom_call.1} parent=1 // loop_footer
      %s47 = sadd.s32 1, %s43
    $region7: #{tpu_custom_call.1} parent=1 // loop_footer_branch
      %42 = sbr.rel target = $region3
    $region8: #{tpu_custom_call.1} parent=1 // loop_exit
      _
    %2288 = vsyncpa [#allocation3], 1
    %s2289 = scalar_lea.sflag [#allocation3], 1
    %2290 = vsyncpa %s2289, 1
    %2291 = vsyncpa [#allocation5], 1
    %s2292 = scalar_lea.sflag [#allocation5], 1
    %2293 = vsyncpa %s2292, 1
    %2294 = vsyncpa [#allocation8], 1
    %s2295 = scalar_lea.sflag [#allocation8], 1
    %2296 = vsyncpa %s2295, 1

</llo_original>
